<compile_context>
chip_gen: v7x
topology: tpu7x:2x2x1
jax: 0.10.0
libtpu: 0.0.40
codegen_flags: <defaults>
</compile_context>

<pallas_src>
import jax
import jax.numpy as jnp
import numpy as np
from jax import lax
from jax.experimental import pallas as pl
from jax.experimental.pallas import tpu as pltpu

B = 8            # example batch (parametric; review: run >= 8 per call)
H = 164          # input height (NCHW H)
W = 4            # input width  (NCHW W)
KH = 6           # conv4 kernel height (kernel is (6, 1))
C = 32           # conv4 out channels
HO = H - KH + 1  # 159, matches MaxPool2d((159, 1))
HO_PAD = 160     # padded to a multiple of 8 sublanes (row 159 duplicates 158)
LANES = W * C    # 128 ; conv-output lane index l = w*C + c
K_IM2COL = KH * W  # 24 real im2col lanes (k = kh*W + w)
F1_IN, F1_OUT = 512, 128
F2_OUT = 2
MAX_CHUNK = 64   # batch rows per grid step when B_pad > 64

# misc (f32) parameter block rows
R_BC = 0   # conv bias, lane w*C+c = bc[c]
R_B1 = 1   # fc1 bias
R_W20 = 2  # fc2 weight row 0 (lane = fc1 output index)
R_W21 = 3  # fc2 weight row 1
R_B2 = 4   # fc2 bias in lanes 0..1
MISC_ROWS = 8


def cnn_kernel(x_ref, wmat_ref, misc_ref, out_ref):
    # x_ref   : [bb, 160, 128] bf16 im2col input (lanes 0..23 real, rest zero)
    # wmat_ref: [256, 128] bf16  (rows 0..127 conv RHS, rows 128..255 fused fc1)
    # misc_ref: [8, 128]   f32   (biases + 2 fc2 weight rows)
    # out_ref : [bb, 128]  f32   (softmax probs in lanes 0..1)
    bb = x_ref.shape[0]

    # ---- conv4 (Conv2d(1,32,(6,1))) as ONE MXU matmul over im2col lanes ----
    x2 = x_ref[...].reshape(bb * HO_PAD, LANES)                     # bf16
    conv = jnp.dot(x2, wmat_ref[0:LANES, :],
                   preferred_element_type=jnp.float32)              # [bb*160,128] f32
    conv = conv.reshape(bb, HO_PAD, LANES)

    # ---- MaxPool2d((159,1)) over H, then conv bias + ReLU (hoisted past pool) ----
    pooled = jnp.max(conv, axis=1)                                  # [bb, 128]
    pooled = jnp.maximum(pooled + misc_ref[R_BC:R_BC + 1, :], 0.0)

    # ---- cat of 4 identical branches + flatten + fc1: one 128x128 MXU matmul ----
    h1 = jnp.dot(pooled.astype(jnp.bfloat16), wmat_ref[LANES:2 * LANES, :],
                 preferred_element_type=jnp.float32)                # [bb, 128]
    h1 = jnp.maximum(h1 + misc_ref[R_B1:R_B1 + 1, :], 0.0)
    # nn.Dropout: identity at inference time

    # ---- fc2 (2 outputs) as two lane-multiplies + XLU lane-sums (f32) ----
    s0 = jnp.sum(h1 * misc_ref[R_W20:R_W20 + 1, :], axis=-1, keepdims=True)  # [bb,1]
    s1 = jnp.sum(h1 * misc_ref[R_W21:R_W21 + 1, :], axis=-1, keepdims=True)  # [bb,1]

    # ---- ReLU + Softmax(dim=1), lane-dense into a full 128-lane tile ----
    lane = lax.broadcasted_iota(jnp.int32, (bb, LANES), 1)
    z = jnp.where(lane == 0, s0, s1) + misc_ref[R_B2:R_B2 + 1, :]   # lanes 0/1 = logits
    z = jnp.maximum(z, 0.0)                                         # ReLU before softmax
    z = jnp.where(lane < F2_OUT, z, -jnp.inf)                       # mask pad lanes
    m = jnp.max(z, axis=-1, keepdims=True)
    e = jnp.exp(z - m)                                              # pad lanes -> 0
    out_ref[...] = e / jnp.sum(e, axis=-1, keepdims=True)


def _padded_batch(b):
    bp = max(8, -(-b // 8) * 8)
    if bp > MAX_CHUNK:
        bp = -(-bp // MAX_CHUNK) * MAX_CHUNK
    return bp


def custom_cnn_forward(x_im2col, wmat, misc, batch):
    b_pad = x_im2col.shape[0]
    bb = b_pad if b_pad <= MAX_CHUNK else MAX_CHUNK
    grid = (b_pad // bb,)

    flops = 2 * b_pad * HO_PAD * LANES * LANES + 2 * b_pad * LANES * LANES \
            + 6 * b_pad * LANES
    bytes_accessed = (x_im2col.size * 2 + wmat.size * 2 + misc.size * 4
                      + b_pad * LANES * 4)

    out = pl.pallas_call(
        cnn_kernel,
        out_shape=jax.ShapeDtypeStruct((b_pad, LANES), jnp.float32),
        grid=grid,
        in_specs=[
            pl.BlockSpec((bb, HO_PAD, LANES), lambda i: (i, 0, 0)),
            pl.BlockSpec((2 * LANES, LANES), lambda i: (0, 0)),
            pl.BlockSpec((MISC_ROWS, LANES), lambda i: (0, 0)),
        ],
        out_specs=pl.BlockSpec((bb, LANES), lambda i: (i, 0)),
        compiler_params=pltpu.CompilerParams(dimension_semantics=("parallel",)),
        cost_estimate=pl.CostEstimate(flops=flops, transcendentals=b_pad * LANES,
                                      bytes_accessed=bytes_accessed),
    )(x_im2col, wmat, misc)
    return out[:batch, :F2_OUT]


# ---------------- host-side (plain-JAX) layout glue ----------------

def pack_input(x_bhw):
    """[B, H, W] f32 -> im2col [B_pad, 160, 128] bf16, lane k = kh*W + w."""
    b = x_bhw.shape[0]
    b_pad = _padded_batch(b)
    h_idx = jnp.minimum(jnp.arange(HO_PAD), HO - 1)          # clamp pad row -> 158
    cols = jnp.concatenate([x_bhw[:, h_idx + kh, :] for kh in range(KH)],
                           axis=-1)                           # [B, 160, 24]
    out = jnp.zeros((b_pad, HO_PAD, LANES), jnp.bfloat16)
    return out.at[:b, :, :K_IM2COL].set(cols.astype(jnp.bfloat16))


def pack_params(raw):
    """Fold 4 identical branches + NCHW flatten into fc1; pack into 2 blocks."""
    wc, bc, w1, b1, w2, b2 = raw

    # conv RHS: R[kh*W + w, w*C + c] = wc[c, kh]  (zero elsewhere)
    R = jnp.zeros((LANES, LANES), jnp.float32)
    for kh in range(KH):
        for w in range(W):
            R = R.at[kh * W + w, w * C:(w + 1) * C].set(wc[:, kh])

    # PyTorch flatten feature index f = 128*g + 4*c + w (g = branch 0..3).
    w1r = w1.reshape(F1_OUT, 4, C, W).sum(axis=1)             # [out, c, w]
    w1_k = jnp.transpose(w1r, (2, 1, 0)).reshape(LANES, F1_OUT)  # [(w*C+c), out]

    wmat = jnp.concatenate([R, w1_k], axis=0).astype(jnp.bfloat16)  # [256, 128]

    misc = jnp.zeros((MISC_ROWS, LANES), jnp.float32)
    misc = misc.at[R_BC, :].set(jnp.tile(bc, W))              # lane w*C+c = bc[c]
    misc = misc.at[R_B1, :].set(b1)
    misc = misc.at[R_W20, :].set(w2[0])
    misc = misc.at[R_W21, :].set(w2[1])
    misc = misc.at[R_B2, :F2_OUT].set(b2)
    return wmat, misc


def init_params(key):
    """Deterministic PyTorch-style (uniform +/- 1/sqrt(fan_in)) init."""
    ks = jax.random.split(key, 6)
    bc_bound = 1.0 / np.sqrt(1 * KH * 1)
    wc = jax.random.uniform(ks[0], (C, KH), jnp.float32, -bc_bound, bc_bound)
    bc = jax.random.uniform(ks[1], (C,), jnp.float32, -bc_bound, bc_bound)
    b1_bound = 1.0 / np.sqrt(F1_IN)
    w1 = jax.random.uniform(ks[2], (F1_OUT, F1_IN), jnp.float32, -b1_bound, b1_bound)
    b1 = jax.random.uniform(ks[3], (F1_OUT,), jnp.float32, -b1_bound, b1_bound)
    b2_bound = 1.0 / np.sqrt(F1_OUT)
    w2 = jax.random.uniform(ks[4], (F2_OUT, F1_OUT), jnp.float32, -b2_bound, b2_bound)
    b2 = jax.random.uniform(ks[5], (F2_OUT,), jnp.float32, -b2_bound, b2_bound)
    return (wc, bc, w1, b1, w2, b2)


def reference_forward(x_bhw, raw):
    """Pure-JAX f32 mirror of the exact PyTorch forward (correctness check)."""
    wc, bc, w1, b1, w2, b2 = raw
    b = x_bhw.shape[0]
    conv = jnp.zeros((b, C, HO, W), jnp.float32)
    for kh in range(KH):
        conv = conv + x_bhw[:, None, kh:kh + HO, :] * wc[None, :, kh, None, None]
    conv = jnp.maximum(conv + bc[None, :, None, None], 0.0)      # [B, 32, 159, 4]
    ycat = jnp.concatenate([conv, conv, conv, conv], axis=1)     # [B, 128, 159, 4]
    pooled = jnp.max(ycat, axis=2, keepdims=True)                # [B, 128, 1, 4]
    flat = pooled.reshape(b, -1)                                 # [B, 512]
    h1 = jnp.maximum(flat @ w1.T + b1, 0.0)
    h2 = jnp.maximum(h1 @ w2.T + b2, 0.0)
    return jax.nn.softmax(h2, axis=1)


if __name__ == "__main__":
    key = jax.random.PRNGKey(0)
    kp, kx = jax.random.split(key)
    raw = init_params(kp)
    wmat, misc = pack_params(raw)

    x_nchw = jax.random.normal(kx, (B, 1, H, W), jnp.float32)    # PyTorch NCHW input
    x_bhw = x_nchw[:, 0, :, :]                                   # [B, H, W]

    fwd = jax.jit(lambda xb, wm, ms: custom_cnn_forward(pack_input(xb), wm, ms, batch=B))
    out = jax.block_until_ready(fwd(x_bhw, wmat, misc))

    ref = jax.block_until_ready(reference_forward(x_bhw, raw))
    # bf16 MXU operands (f32 accumulation) -> looser tolerance than pure f32.
    np.testing.assert_allclose(np.asarray(out), np.asarray(ref), atol=2e-2, rtol=2e-2)

    print("KERNEL_OK")
</pallas_src>

<mosaic_0001>
module attributes {stable_mosaic.version = 11 : i64} {
  func.func @cnn_kernel(%arg0: i32, %arg1: memref<8x160x128xbf16, #tpu.memory_space<vmem>>, %arg2: memref<256x128xbf16, #tpu.memory_space<vmem>>, %arg3: memref<8x128xf32, #tpu.memory_space<vmem>>, %arg4: memref<8x128xf32, #tpu.memory_space<vmem>>) attributes {dimension_semantics = [#tpu.dimension_semantics<parallel>], iteration_bounds = array<i64: 1>, scalar_prefetch = 0 : i64, scratch_operands = 0 : i64, tpu.core_type = #tpu.core_type<tc>, window_params = [{transform_indices = @transform_0, window_bounds = array<i64: 8, 160, 128>}, {pipeline_mode = #tpu.pipeline_mode<synchronous>, transform_indices = @transform_1, window_bounds = array<i64: 256, 128>}, {pipeline_mode = #tpu.pipeline_mode<synchronous>, transform_indices = @transform_2, window_bounds = array<i64: 8, 128>}, {transform_indices = @transform_3, window_bounds = array<i64: 8, 128>}]} {
    %c0 = arith.constant 0 : index
    %c0_0 = arith.constant 0 : index
    %c0_1 = arith.constant 0 : index
    %0 = vector.load %arg1[%c0, %c0_0, %c0_1] : memref<8x160x128xbf16, #tpu.memory_space<vmem>>, vector<8x160x128xbf16>
    %1 = vector.shape_cast %0 : vector<8x160x128xbf16> to vector<1280x128xbf16>
    %c0_2 = arith.constant 0 : index
    %c0_3 = arith.constant 0 : index
    %2 = vector.load %arg2[%c0_2, %c0_3] : memref<256x128xbf16, #tpu.memory_space<vmem>>, vector<128x128xbf16>
    %cst = arith.constant dense<0.000000e+00> : vector<1280x128xf32>
    %3 = tpu.matmul %1, %2, %cst {dimension_numbers = #tpu.dot_dimension_numbers<[1], [0], [0], [1], [0, 0, 1, 1], [], []>} : vector<1280x128xbf16>, vector<128x128xbf16>, vector<1280x128xf32> -> vector<1280x128xf32>
    %4 = vector.shape_cast %3 : vector<1280x128xf32> to vector<8x160x128xf32>
    %cst_4 = arith.constant dense<0xFF800000> : vector<8x128xf32>
    %5 = vector.multi_reduction <maximumf>, %4, %cst_4 [1] : vector<8x160x128xf32> to vector<8x128xf32>
    %c0_5 = arith.constant 0 : index
    %c0_6 = arith.constant 0 : index
    %6 = vector.load %arg3[%c0_5, %c0_6] : memref<8x128xf32, #tpu.memory_space<vmem>>, vector<1x128xf32>
    %7 = vector.broadcast %6 : vector<1x128xf32> to vector<8x128xf32>
    %8 = arith.addf %5, %7 : vector<8x128xf32>
    %cst_7 = arith.constant 0.000000e+00 : f32
    %9 = vector.broadcast %cst_7 : f32 to vector<8x128xf32>
    %10 = arith.maximumf %8, %9 : vector<8x128xf32>
    %11 = arith.truncf %10 : vector<8x128xf32> to vector<8x128xbf16>
    %c128 = arith.constant 128 : index
    %c0_8 = arith.constant 0 : index
    %12 = vector.load %arg2[%c128, %c0_8] : memref<256x128xbf16, #tpu.memory_space<vmem>>, vector<128x128xbf16>
    %cst_9 = arith.constant dense<0.000000e+00> : vector<8x128xf32>
    %13 = tpu.matmul %11, %12, %cst_9 {dimension_numbers = #tpu.dot_dimension_numbers<[1], [0], [0], [1], [0, 0, 1, 1], [], []>} : vector<8x128xbf16>, vector<128x128xbf16>, vector<8x128xf32> -> vector<8x128xf32>
    %c1 = arith.constant 1 : index
    %c0_10 = arith.constant 0 : index
    %14 = vector.load %arg3[%c1, %c0_10] : memref<8x128xf32, #tpu.memory_space<vmem>>, vector<1x128xf32>
    %15 = vector.broadcast %14 : vector<1x128xf32> to vector<8x128xf32>
    %16 = arith.addf %13, %15 : vector<8x128xf32>
    %cst_11 = arith.constant 0.000000e+00 : f32
    %17 = vector.broadcast %cst_11 : f32 to vector<8x128xf32>
    %18 = arith.maximumf %16, %17 : vector<8x128xf32>
    %c2 = arith.constant 2 : index
    %c0_12 = arith.constant 0 : index
    %19 = vector.load %arg3[%c2, %c0_12] : memref<8x128xf32, #tpu.memory_space<vmem>>, vector<1x128xf32>
    %20 = vector.broadcast %19 : vector<1x128xf32> to vector<8x128xf32>
    %21 = arith.mulf %18, %20 : vector<8x128xf32>
    %cst_13 = arith.constant dense<0.000000e+00> : vector<8xf32>
    %22 = vector.multi_reduction <add>, %21, %cst_13 [1] : vector<8x128xf32> to vector<8xf32>
    %23 = vector.shape_cast %22 : vector<8xf32> to vector<8x1xf32>
    %c3 = arith.constant 3 : index
    %c0_14 = arith.constant 0 : index
    %24 = vector.load %arg3[%c3, %c0_14] : memref<8x128xf32, #tpu.memory_space<vmem>>, vector<1x128xf32>
    %25 = vector.broadcast %24 : vector<1x128xf32> to vector<8x128xf32>
    %26 = arith.mulf %18, %25 : vector<8x128xf32>
    %cst_15 = arith.constant dense<0.000000e+00> : vector<8xf32>
    %27 = vector.multi_reduction <add>, %26, %cst_15 [1] : vector<8x128xf32> to vector<8xf32>
    %28 = vector.shape_cast %27 : vector<8xf32> to vector<8x1xf32>
    %29 = tpu.iota {dimensions = array<i32: 1>} : vector<8x128xi32>
    %c0_i32 = arith.constant 0 : i32
    %30 = vector.broadcast %c0_i32 : i32 to vector<8x128xi32>
    %31 = arith.cmpi eq, %29, %30 : vector<8x128xi32>
    %32 = vector.shape_cast %23 : vector<8x1xf32> to vector<8x1xf32>
    %33 = vector.broadcast %32 : vector<8x1xf32> to vector<8x128xf32>
    %34 = vector.shape_cast %28 : vector<8x1xf32> to vector<8x1xf32>
    %35 = vector.broadcast %34 : vector<8x1xf32> to vector<8x128xf32>
    %36 = arith.select %31, %33, %35 : vector<8x128xi1>, vector<8x128xf32>
    %c4 = arith.constant 4 : index
    %c0_16 = arith.constant 0 : index
    %37 = vector.load %arg3[%c4, %c0_16] : memref<8x128xf32, #tpu.memory_space<vmem>>, vector<1x128xf32>
    %38 = vector.broadcast %37 : vector<1x128xf32> to vector<8x128xf32>
    %39 = arith.addf %36, %38 : vector<8x128xf32>
    %cst_17 = arith.constant 0.000000e+00 : f32
    %40 = vector.broadcast %cst_17 : f32 to vector<8x128xf32>
    %41 = arith.maximumf %39, %40 : vector<8x128xf32>
    %c2_i32 = arith.constant 2 : i32
    %42 = vector.broadcast %c2_i32 : i32 to vector<8x128xi32>
    %43 = arith.cmpi slt, %29, %42 : vector<8x128xi32>
    %cst_18 = arith.constant 0xFF800000 : f32
    %44 = vector.broadcast %cst_18 : f32 to vector<8x128xf32>
    %45 = arith.select %43, %41, %44 : vector<8x128xi1>, vector<8x128xf32>
    %cst_19 = arith.constant dense<0xFF800000> : vector<8xf32>
    %46 = vector.multi_reduction <maximumf>, %45, %cst_19 [1] : vector<8x128xf32> to vector<8xf32>
    %47 = vector.shape_cast %46 : vector<8xf32> to vector<8x1xf32>
    %48 = vector.broadcast %47 : vector<8x1xf32> to vector<8x128xf32>
    %49 = arith.subf %45, %48 : vector<8x128xf32>
    %50 = math.exp %49 : vector<8x128xf32>
    %cst_20 = arith.constant dense<0.000000e+00> : vector<8xf32>
    %51 = vector.multi_reduction <add>, %50, %cst_20 [1] : vector<8x128xf32> to vector<8xf32>
    %52 = vector.shape_cast %51 : vector<8xf32> to vector<8x1xf32>
    %53 = vector.broadcast %52 : vector<8x1xf32> to vector<8x128xf32>
    %54 = arith.divf %50, %53 : vector<8x128xf32>
    %c0_21 = arith.constant 0 : index
    %c0_22 = arith.constant 0 : index
    %55 = vector.load %arg4[%c0_21, %c0_22] : memref<8x128xf32, #tpu.memory_space<vmem>>, vector<8x128xf32>
    tpu.vector_store %arg4[%c0_21, %c0_22], %54 {strides = array<i32>} : memref<8x128xf32, #tpu.memory_space<vmem>>, vector<8x128xf32>,
    return
  }
  func.func @transform_0(%arg0: i32) -> (i32, i32, i32) {
    %c0_i32 = arith.constant 0 : i32
    %c0_i32_0 = arith.constant 0 : i32
    %c0_i32_1 = arith.constant 0 : i32
    return %arg0, %c0_i32, %c0_i32_0 : i32, i32, i32
  }
  func.func @transform_1(%arg0: i32) -> (i32, i32) {
    %c0_i32 = arith.constant 0 : i32
    %c0_i32_0 = arith.constant 0 : i32
    %c0_i32_1 = arith.constant 0 : i32
    return %c0_i32, %c0_i32_0 : i32, i32
  }
  func.func @transform_2(%arg0: i32) -> (i32, i32) {
    %c0_i32 = arith.constant 0 : i32
    %c0_i32_0 = arith.constant 0 : i32
    %c0_i32_1 = arith.constant 0 : i32
    return %c0_i32, %c0_i32_0 : i32, i32
  }
  func.func @transform_3(%arg0: i32) -> (i32, i32) {
    %c0_i32 = arith.constant 0 : i32
    %c0_i32_0 = arith.constant 0 : i32
    return %arg0, %c0_i32 : i32, i32
  }
}

</mosaic_0001>

<llo_original>
// kernel: _lambda_.1
$region0: #{_lambda_.1}
  #allocation0 [shape = 'u32[]', space=smem, size = 0x4, offset = 0x4, fixed_abs, tag = 'smem constant byte address 0x4 - core index']
  #allocation1 [shape = 'u32[144,128]{1,0:T(1,128)}', space=vmem, size = 0x12000, scoped, tag = 'internal scratch']
  %s0 = inlined_call_operand.vmem [shape: bf16[8,160,128], index: 0, kind: input, shape index: {}]
  %s1 = inlined_call_operand.vmem [shape: bf16[256,128], index: 1, kind: input, shape index: {}]
  %s2 = inlined_call_operand.vmem [shape: f32[8,128], index: 2, kind: input, shape index: {}]
  %s3 = inlined_call_operand.vmem [shape: f32[8,128], index: 3, kind: output, shape index: {}]
  %s4 = sld [smem:[#allocation0]]
  $region22: #{_lambda_.1} parent=0
    _
  %s6 = ssub.s32 1, %s4
  %s7 = scalar_select 0, %s6, %s4
  // Predicated region
  $region2: #{_lambda_.1} parent=0 // pred_check
    _
  $region3: #{_lambda_.1} parent=0 // pred_check_branch
    %9 = sbr.rel (0) target = $region5
  $region4: #{_lambda_.1} parent=0 // pred_region
    _
  $region5: #{_lambda_.1} parent=0 // pred_fallthru
    _
  // Predicated region
  $region6: #{_lambda_.1} parent=0 // pred_check
    _
  $region7: #{_lambda_.1} parent=0 // pred_check_branch
    %11 = sbr.rel (0) target = $region9
  $region8: #{_lambda_.1} parent=0 // pred_region
    _
  $region9: #{_lambda_.1} parent=0 // pred_fallthru
    _
  // Predicated region
  $region10: #{_lambda_.1} parent=0 // pred_check
    _
  $region11: #{_lambda_.1} parent=0 // pred_check_branch
    %13 = sbr.rel (0) target = $region13
  $region12: #{_lambda_.1} parent=0 // pred_region
    _
  $region13: #{_lambda_.1} parent=0 // pred_fallthru
    _
  %v15 = vld [vmem:[%s0] sm:$0xf]
  %v16 = vld [vmem:[%s0 + $0x4] sm:$0xf]
  %v17 = vld [vmem:[%s0 + $0x8] sm:$0xf]
  %v18 = vld [vmem:[%s0 + $0xc] sm:$0xf]
  %v19 = vld [vmem:[%s0 + $0x10] sm:$0xf]
  %v20 = vld [vmem:[%s0 + $0x14] sm:$0xf]
  %v21 = vld [vmem:[%s0 + $0x18] sm:$0xf]
  %v22 = vld [vmem:[%s0 + $0x1c] sm:$0xf]
  %v23 = vld [vmem:[%s0 + $0x20] sm:$0xf]
  %v24 = vld [vmem:[%s0 + $0x24] sm:$0xf]
  %v25 = vld [vmem:[%s0 + $0x28] sm:$0xf]
  %v26 = vld [vmem:[%s0 + $0x2c] sm:$0xf]
  %v27 = vld [vmem:[%s0 + $0x30] sm:$0xf]
  %v28 = vld [vmem:[%s0 + $0x34] sm:$0xf]
  %v29 = vld [vmem:[%s0 + $0x38] sm:$0xf]
  %v30 = vld [vmem:[%s0 + $0x3c] sm:$0xf]
  %v31 = vld [vmem:[%s0 + $0x40] sm:$0xf]
  %v32 = vld [vmem:[%s0 + $0x44] sm:$0xf]
  %v33 = vld [vmem:[%s0 + $0x48] sm:$0xf]
  %v34 = vld [vmem:[%s0 + $0x4c] sm:$0xf]
  %v35 = vld [vmem:[%s0 + $0x50] sm:$0xf]
  %v36 = vld [vmem:[%s0 + $0x54] sm:$0xf]
  %v37 = vld [vmem:[%s0 + $0x58] sm:$0xf]
  %v38 = vld [vmem:[%s0 + $0x5c] sm:$0xf]
  %v39 = vld [vmem:[%s0 + $0x60] sm:$0xf]
  %v40 = vld [vmem:[%s0 + $0x64] sm:$0xf]
  %v41 = vld [vmem:[%s0 + $0x68] sm:$0xf]
  %v42 = vld [vmem:[%s0 + $0x6c] sm:$0xf]
  %v43 = vld [vmem:[%s0 + $0x70] sm:$0xf]
  %v44 = vld [vmem:[%s0 + $0x74] sm:$0xf]
  %v45 = vld [vmem:[%s0 + $0x78] sm:$0xf]
  %v46 = vld [vmem:[%s0 + $0x7c] sm:$0xf]
  %v47 = vld [vmem:[%s0 + $0x80] sm:$0xf]
  %v48 = vld [vmem:[%s0 + $0x84] sm:$0xf]
  %v49 = vld [vmem:[%s0 + $0x88] sm:$0xf]
  %v50 = vld [vmem:[%s0 + $0x8c] sm:$0xf]
  %v51 = vld [vmem:[%s0 + $0x90] sm:$0xf]
  %v52 = vld [vmem:[%s0 + $0x94] sm:$0xf]
  %v53 = vld [vmem:[%s0 + $0x98] sm:$0xf]
  %v54 = vld [vmem:[%s0 + $0x9c] sm:$0xf]
  %v55 = vld [vmem:[%s0 + $0xa0] sm:$0xf]
  %v56 = vld [vmem:[%s0 + $0xa4] sm:$0xf]
  %v57 = vld [vmem:[%s0 + $0xa8] sm:$0xf]
  %v58 = vld [vmem:[%s0 + $0xac] sm:$0xf]
  %v59 = vld [vmem:[%s0 + $0xb0] sm:$0xf]
  %v60 = vld [vmem:[%s0 + $0xb4] sm:$0xf]
  %v61 = vld [vmem:[%s0 + $0xb8] sm:$0xf]
  %v62 = vld [vmem:[%s0 + $0xbc] sm:$0xf]
  %v63 = vld [vmem:[%s0 + $0xc0] sm:$0xf]
  %v64 = vld [vmem:[%s0 + $0xc4] sm:$0xf]
  %v65 = vld [vmem:[%s0 + $0xc8] sm:$0xf]
  %v66 = vld [vmem:[%s0 + $0xcc] sm:$0xf]
  %v67 = vld [vmem:[%s0 + $0xd0] sm:$0xf]
  %v68 = vld [vmem:[%s0 + $0xd4] sm:$0xf]
  %v69 = vld [vmem:[%s0 + $0xd8] sm:$0xf]
  %v70 = vld [vmem:[%s0 + $0xdc] sm:$0xf]
  %v71 = vld [vmem:[%s0 + $0xe0] sm:$0xf]
  %v72 = vld [vmem:[%s0 + $0xe4] sm:$0xf]
  %v73 = vld [vmem:[%s0 + $0xe8] sm:$0xf]
  %v74 = vld [vmem:[%s0 + $0xec] sm:$0xf]
  %v75 = vld [vmem:[%s0 + $0xf0] sm:$0xf]
  %v76 = vld [vmem:[%s0 + $0xf4] sm:$0xf]
  %v77 = vld [vmem:[%s0 + $0xf8] sm:$0xf]
  %v78 = vld [vmem:[%s0 + $0xfc] sm:$0xf]
  %v79 = vld [vmem:[%s0 + $0x100] sm:$0xf]
  %v80 = vld [vmem:[%s0 + $0x104] sm:$0xf]
  %v81 = vld [vmem:[%s0 + $0x108] sm:$0xf]
  %v82 = vld [vmem:[%s0 + $0x10c] sm:$0xf]
  %v83 = vld [vmem:[%s0 + $0x110] sm:$0xf]
  %v84 = vld [vmem:[%s0 + $0x114] sm:$0xf]
  %v85 = vld [vmem:[%s0 + $0x118] sm:$0xf]
  %v86 = vld [vmem:[%s0 + $0x11c] sm:$0xf]
  %v87 = vld [vmem:[%s0 + $0x120] sm:$0xf]
  %v88 = vld [vmem:[%s0 + $0x124] sm:$0xf]
  %v89 = vld [vmem:[%s0 + $0x128] sm:$0xf]
  %v90 = vld [vmem:[%s0 + $0x12c] sm:$0xf]
  %v91 = vld [vmem:[%s0 + $0x130] sm:$0xf]
  %v92 = vld [vmem:[%s0 + $0x134] sm:$0xf]
  %v93 = vld [vmem:[%s0 + $0x138] sm:$0xf]
  %v94 = vld [vmem:[%s0 + $0x13c] sm:$0xf]
  %v95 = vld [vmem:[%s0 + $0x140] sm:$0xf]
  %v96 = vld [vmem:[%s0 + $0x144] sm:$0xf]
  %v97 = vld [vmem:[%s0 + $0x148] sm:$0xf]
  %v98 = vld [vmem:[%s0 + $0x14c] sm:$0xf]
  %v99 = vld [vmem:[%s0 + $0x150] sm:$0xf]
  %v100 = vld [vmem:[%s0 + $0x154] sm:$0xf]
  %v101 = vld [vmem:[%s0 + $0x158] sm:$0xf]
  %v102 = vld [vmem:[%s0 + $0x15c] sm:$0xf]
  %v103 = vld [vmem:[%s0 + $0x160] sm:$0xf]
  %v104 = vld [vmem:[%s0 + $0x164] sm:$0xf]
  %v105 = vld [vmem:[%s0 + $0x168] sm:$0xf]
  %v106 = vld [vmem:[%s0 + $0x16c] sm:$0xf]
  %v107 = vld [vmem:[%s0 + $0x170] sm:$0xf]
  %v108 = vld [vmem:[%s0 + $0x174] sm:$0xf]
  %v109 = vld [vmem:[%s0 + $0x178] sm:$0xf]
  %v110 = vld [vmem:[%s0 + $0x17c] sm:$0xf]
  %v111 = vld [vmem:[%s0 + $0x180] sm:$0xf]
  %v112 = vld [vmem:[%s0 + $0x184] sm:$0xf]
  %v113 = vld [vmem:[%s0 + $0x188] sm:$0xf]
  %v114 = vld [vmem:[%s0 + $0x18c] sm:$0xf]
  %v115 = vld [vmem:[%s0 + $0x190] sm:$0xf]
  %v116 = vld [vmem:[%s0 + $0x194] sm:$0xf]
  %v117 = vld [vmem:[%s0 + $0x198] sm:$0xf]
  %v118 = vld [vmem:[%s0 + $0x19c] sm:$0xf]
  %v119 = vld [vmem:[%s0 + $0x1a0] sm:$0xf]
  %v120 = vld [vmem:[%s0 + $0x1a4] sm:$0xf]
  %v121 = vld [vmem:[%s0 + $0x1a8] sm:$0xf]
  %v122 = vld [vmem:[%s0 + $0x1ac] sm:$0xf]
  %v123 = vld [vmem:[%s0 + $0x1b0] sm:$0xf]
  %v124 = vld [vmem:[%s0 + $0x1b4] sm:$0xf]
  %v125 = vld [vmem:[%s0 + $0x1b8] sm:$0xf]
  %v126 = vld [vmem:[%s0 + $0x1bc] sm:$0xf]
  %v127 = vld [vmem:[%s0 + $0x1c0] sm:$0xf]
  %v128 = vld [vmem:[%s0 + $0x1c4] sm:$0xf]
  %v129 = vld [vmem:[%s0 + $0x1c8] sm:$0xf]
  %v130 = vld [vmem:[%s0 + $0x1cc] sm:$0xf]
  %v131 = vld [vmem:[%s0 + $0x1d0] sm:$0xf]
  %v132 = vld [vmem:[%s0 + $0x1d4] sm:$0xf]
  %v133 = vld [vmem:[%s0 + $0x1d8] sm:$0xf]
  %v134 = vld [vmem:[%s0 + $0x1dc] sm:$0xf]
  %v135 = vld [vmem:[%s0 + $0x1e0] sm:$0xf]
  %v136 = vld [vmem:[%s0 + $0x1e4] sm:$0xf]
  %v137 = vld [vmem:[%s0 + $0x1e8] sm:$0xf]
  %v138 = vld [vmem:[%s0 + $0x1ec] sm:$0xf]
  %v139 = vld [vmem:[%s0 + $0x1f0] sm:$0xf]
  %v140 = vld [vmem:[%s0 + $0x1f4] sm:$0xf]
  %v141 = vld [vmem:[%s0 + $0x1f8] sm:$0xf]
  %v142 = vld [vmem:[%s0 + $0x1fc] sm:$0xf]
  %v143 = vld [vmem:[%s0 + $0x200] sm:$0xf]
  %v144 = vld [vmem:[%s0 + $0x204] sm:$0xf]
  %v145 = vld [vmem:[%s0 + $0x208] sm:$0xf]
  %v146 = vld [vmem:[%s0 + $0x20c] sm:$0xf]
  %v147 = vld [vmem:[%s0 + $0x210] sm:$0xf]
  %v148 = vld [vmem:[%s0 + $0x214] sm:$0xf]
  %v149 = vld [vmem:[%s0 + $0x218] sm:$0xf]
  %v150 = vld [vmem:[%s0 + $0x21c] sm:$0xf]
  %v151 = vld [vmem:[%s0 + $0x220] sm:$0xf]
  %v152 = vld [vmem:[%s0 + $0x224] sm:$0xf]
  %v153 = vld [vmem:[%s0 + $0x228] sm:$0xf]
  %v154 = vld [vmem:[%s0 + $0x22c] sm:$0xf]
  %v155 = vld [vmem:[%s0 + $0x230] sm:$0xf]
  %v156 = vld [vmem:[%s0 + $0x234] sm:$0xf]
  %v157 = vld [vmem:[%s0 + $0x238] sm:$0xf]
  %v158 = vld [vmem:[%s0 + $0x23c] sm:$0xf]
  %v159 = vld [vmem:[%s0 + $0x240] sm:$0xf]
  %v160 = vld [vmem:[%s0 + $0x244] sm:$0xf]
  %v161 = vld [vmem:[%s0 + $0x248] sm:$0xf]
  %v162 = vld [vmem:[%s0 + $0x24c] sm:$0xf]
  %v163 = vld [vmem:[%s0 + $0x250] sm:$0xf]
  %v164 = vld [vmem:[%s0 + $0x254] sm:$0xf]
  %v165 = vld [vmem:[%s0 + $0x258] sm:$0xf]
  %v166 = vld [vmem:[%s0 + $0x25c] sm:$0xf]
  %v167 = vld [vmem:[%s0 + $0x260] sm:$0xf]
  %v168 = vld [vmem:[%s0 + $0x264] sm:$0xf]
  %v169 = vld [vmem:[%s0 + $0x268] sm:$0xf]
  %v170 = vld [vmem:[%s0 + $0x26c] sm:$0xf]
  %v171 = vld [vmem:[%s0 + $0x270] sm:$0xf]
  %v172 = vld [vmem:[%s0 + $0x274] sm:$0xf]
  %v173 = vld [vmem:[%s0 + $0x278] sm:$0xf]
  %v174 = vld [vmem:[%s0 + $0x27c] sm:$0xf]
  %v175 = vld [vmem:[%s1] sm:$0xf]
  %v176 = vld [vmem:[%s1 + $0x4] sm:$0xf]
  %v177 = vld [vmem:[%s1 + $0x8] sm:$0xf]
  %v178 = vld [vmem:[%s1 + $0xc] sm:$0xf]
  %v179 = vld [vmem:[%s1 + $0x10] sm:$0xf]
  %v180 = vld [vmem:[%s1 + $0x14] sm:$0xf]
  %v181 = vld [vmem:[%s1 + $0x18] sm:$0xf]
  %v182 = vld [vmem:[%s1 + $0x1c] sm:$0xf]
  %v183 = vld [vmem:[%s1 + $0x20] sm:$0xf]
  %v184 = vld [vmem:[%s1 + $0x24] sm:$0xf]
  %v185 = vld [vmem:[%s1 + $0x28] sm:$0xf]
  %v186 = vld [vmem:[%s1 + $0x2c] sm:$0xf]
  %v187 = vld [vmem:[%s1 + $0x30] sm:$0xf]
  %v188 = vld [vmem:[%s1 + $0x34] sm:$0xf]
  %v189 = vld [vmem:[%s1 + $0x38] sm:$0xf]
  %v190 = vld [vmem:[%s1 + $0x3c] sm:$0xf]
  %v351 = vunpack.c.l.b16 %v15
  %v352 = vunpack.c.l.b16 %v16
  %v353 = vunpack.c.l.b16 %v17
  %v354 = vunpack.c.l.b16 %v18
  %v355 = vunpack.c.l.b16 %v19
  %v356 = vunpack.c.l.b16 %v20
  %v357 = vunpack.c.l.b16 %v21
  %v358 = vunpack.c.l.b16 %v22
  %v359 = vunpack.c.l.b16 %v23
  %v360 = vunpack.c.l.b16 %v24
  %v361 = vunpack.c.l.b16 %v25
  %v362 = vunpack.c.l.b16 %v26
  %v363 = vunpack.c.l.b16 %v27
  %v364 = vunpack.c.l.b16 %v28
  %v365 = vunpack.c.l.b16 %v29
  %v366 = vunpack.c.l.b16 %v30
  %v367 = vunpack.c.l.b16 %v31
  %v368 = vunpack.c.l.b16 %v32
  %v369 = vunpack.c.l.b16 %v33
  %v370 = vunpack.c.l.b16 %v34
  %v371 = vunpack.c.l.b16 %v35
  %v372 = vunpack.c.l.b16 %v36
  %v373 = vunpack.c.l.b16 %v37
  %v374 = vunpack.c.l.b16 %v38
  %v375 = vunpack.c.l.b16 %v39
  %v376 = vunpack.c.l.b16 %v40
  %v377 = vunpack.c.l.b16 %v41
  %v378 = vunpack.c.l.b16 %v42
  %v379 = vunpack.c.l.b16 %v43
  %v380 = vunpack.c.l.b16 %v44
  %v381 = vunpack.c.l.b16 %v45
  %v382 = vunpack.c.l.b16 %v46
  %v383 = vunpack.c.l.b16 %v47
  %v384 = vunpack.c.l.b16 %v48
  %v385 = vunpack.c.l.b16 %v49
  %v386 = vunpack.c.l.b16 %v50
  %v387 = vunpack.c.l.b16 %v51
  %v388 = vunpack.c.l.b16 %v52
  %v389 = vunpack.c.l.b16 %v53
  %v390 = vunpack.c.l.b16 %v54
  %v391 = vunpack.c.l.b16 %v55
  %v392 = vunpack.c.l.b16 %v56
  %v393 = vunpack.c.l.b16 %v57
  %v394 = vunpack.c.l.b16 %v58
  %v395 = vunpack.c.l.b16 %v59
  %v396 = vunpack.c.l.b16 %v60
  %v397 = vunpack.c.l.b16 %v61
  %v398 = vunpack.c.l.b16 %v62
  %v399 = vunpack.c.l.b16 %v63
  %v400 = vunpack.c.l.b16 %v64
  %v401 = vunpack.c.l.b16 %v65
  %v402 = vunpack.c.l.b16 %v66
  %v403 = vunpack.c.l.b16 %v67
  %v404 = vunpack.c.l.b16 %v68
  %v405 = vunpack.c.l.b16 %v69
  %v406 = vunpack.c.l.b16 %v70
  %v407 = vunpack.c.l.b16 %v71
  %v408 = vunpack.c.l.b16 %v72
  %v409 = vunpack.c.l.b16 %v73
  %v410 = vunpack.c.l.b16 %v74
  %v411 = vunpack.c.l.b16 %v75
  %v412 = vunpack.c.l.b16 %v76
  %v413 = vunpack.c.l.b16 %v77
  %v414 = vunpack.c.l.b16 %v78
  %v415 = vunpack.c.l.b16 %v79
  %v416 = vunpack.c.l.b16 %v80
  %v417 = vunpack.c.l.b16 %v81
  %v418 = vunpack.c.l.b16 %v82
  %v419 = vunpack.c.l.b16 %v83
  %v420 = vunpack.c.l.b16 %v84
  %v421 = vunpack.c.l.b16 %v85
  %v422 = vunpack.c.l.b16 %v86
  %v423 = vunpack.c.l.b16 %v87
  %v424 = vunpack.c.l.b16 %v88
  %v425 = vunpack.c.l.b16 %v89
  %v426 = vunpack.c.l.b16 %v90
  %v427 = vunpack.c.l.b16 %v91
  %v428 = vunpack.c.l.b16 %v92
  %v429 = vunpack.c.l.b16 %v93
  %v430 = vunpack.c.l.b16 %v94
  %v431 = vunpack.c.l.b16 %v95
  %v432 = vunpack.c.l.b16 %v96
  %v433 = vunpack.c.l.b16 %v97
  %v434 = vunpack.c.l.b16 %v98
  %v435 = vunpack.c.l.b16 %v99
  %v436 = vunpack.c.l.b16 %v100
  %v437 = vunpack.c.l.b16 %v101
  %v438 = vunpack.c.l.b16 %v102
  %v439 = vunpack.c.l.b16 %v103
  %v440 = vunpack.c.l.b16 %v104
  %v441 = vunpack.c.l.b16 %v105
  %v442 = vunpack.c.l.b16 %v106
  %v443 = vunpack.c.l.b16 %v107
  %v444 = vunpack.c.l.b16 %v108
  %v445 = vunpack.c.l.b16 %v109
  %v446 = vunpack.c.l.b16 %v110
  %v447 = vunpack.c.l.b16 %v111
  %v448 = vunpack.c.l.b16 %v112
  %v449 = vunpack.c.l.b16 %v113
  %v450 = vunpack.c.l.b16 %v114
  %v451 = vunpack.c.l.b16 %v115
  %v452 = vunpack.c.l.b16 %v116
  %v453 = vunpack.c.l.b16 %v117
  %v454 = vunpack.c.l.b16 %v118
  %v455 = vunpack.c.l.b16 %v119
  %v456 = vunpack.c.l.b16 %v120
  %v457 = vunpack.c.l.b16 %v121
  %v458 = vunpack.c.l.b16 %v122
  %v459 = vunpack.c.l.b16 %v123
  %v460 = vunpack.c.l.b16 %v124
  %v461 = vunpack.c.l.b16 %v125
  %v462 = vunpack.c.l.b16 %v126
  %v463 = vunpack.c.l.b16 %v127
  %v464 = vunpack.c.l.b16 %v128
  %v465 = vunpack.c.l.b16 %v129
  %v466 = vunpack.c.l.b16 %v130
  %v467 = vunpack.c.l.b16 %v131
  %v468 = vunpack.c.l.b16 %v132
  %v469 = vunpack.c.l.b16 %v133
  %v470 = vunpack.c.l.b16 %v134
  %v471 = vunpack.c.l.b16 %v135
  %v472 = vunpack.c.l.b16 %v136
  %v473 = vunpack.c.l.b16 %v137
  %v474 = vunpack.c.l.b16 %v138
  %v475 = vunpack.c.l.b16 %v139
  %v476 = vunpack.c.l.b16 %v140
  %v477 = vunpack.c.l.b16 %v141
  %v478 = vunpack.c.l.b16 %v142
  %v479 = vunpack.c.l.b16 %v143
  %v480 = vunpack.c.l.b16 %v144
  %v481 = vunpack.c.l.b16 %v145
  %v482 = vunpack.c.l.b16 %v146
  %v483 = vunpack.c.l.b16 %v147
  %v484 = vunpack.c.l.b16 %v148
  %v485 = vunpack.c.l.b16 %v149
  %v486 = vunpack.c.l.b16 %v150
  %v487 = vunpack.c.l.b16 %v151
  %v488 = vunpack.c.l.b16 %v152
  %v489 = vunpack.c.l.b16 %v153
  %v490 = vunpack.c.l.b16 %v154
  %v491 = vunpack.c.l.b16 %v155
  %v492 = vunpack.c.l.b16 %v156
  %v493 = vunpack.c.l.b16 %v157
  %v494 = vunpack.c.l.b16 %v158
  %v495 = vunpack.c.l.b16 %v159
  %v496 = vunpack.c.l.b16 %v160
  %v497 = vunpack.c.l.b16 %v161
  %v498 = vunpack.c.l.b16 %v162
  %v499 = vunpack.c.l.b16 %v163
  %v500 = vunpack.c.l.b16 %v164
  %v501 = vunpack.c.l.b16 %v165
  %v502 = vunpack.c.l.b16 %v166
  %v503 = vunpack.c.l.b16 %v167
  %v504 = vunpack.c.l.b16 %v168
  %v505 = vunpack.c.l.b16 %v169
  %v506 = vunpack.c.l.b16 %v170
  %v507 = vunpack.c.l.b16 %v171
  %v508 = vunpack.c.l.b16 %v172
  %v509 = vunpack.c.l.b16 %v173
  %v510 = vunpack.c.l.b16 %v174
  %v511 = vpack.c.b16 %v352, %v351
  %v512 = vpack.c.b16 %v354, %v353
  %v513 = vpack.c.b16 %v356, %v355
  %v514 = vpack.c.b16 %v358, %v357
  %v515 = vpack.c.b16 %v360, %v359
  %v516 = vpack.c.b16 %v362, %v361
  %v517 = vpack.c.b16 %v364, %v363
  %v518 = vpack.c.b16 %v366, %v365
  %v519 = vpack.c.b16 %v368, %v367
  %v520 = vpack.c.b16 %v370, %v369
  %v521 = vpack.c.b16 %v372, %v371
  %v522 = vpack.c.b16 %v374, %v373
  %v523 = vpack.c.b16 %v376, %v375
  %v524 = vpack.c.b16 %v378, %v377
  %v525 = vpack.c.b16 %v380, %v379
  %v526 = vpack.c.b16 %v382, %v381
  %v527 = vpack.c.b16 %v384, %v383
  %v528 = vpack.c.b16 %v386, %v385
  %v529 = vpack.c.b16 %v388, %v387
  %v530 = vpack.c.b16 %v390, %v389
  %v531 = vpack.c.b16 %v392, %v391
  %v532 = vpack.c.b16 %v394, %v393
  %v533 = vpack.c.b16 %v396, %v395
  %v534 = vpack.c.b16 %v398, %v397
  %v535 = vpack.c.b16 %v400, %v399
  %v536 = vpack.c.b16 %v402, %v401
  %v537 = vpack.c.b16 %v404, %v403
  %v538 = vpack.c.b16 %v406, %v405
  %v539 = vpack.c.b16 %v408, %v407
  %v540 = vpack.c.b16 %v410, %v409
  %v541 = vpack.c.b16 %v412, %v411
  %v542 = vpack.c.b16 %v414, %v413
  %v543 = vpack.c.b16 %v416, %v415
  %v544 = vpack.c.b16 %v418, %v417
  %v545 = vpack.c.b16 %v420, %v419
  %v546 = vpack.c.b16 %v422, %v421
  %v547 = vpack.c.b16 %v424, %v423
  %v548 = vpack.c.b16 %v426, %v425
  %v549 = vpack.c.b16 %v428, %v427
  %v550 = vpack.c.b16 %v430, %v429
  %v551 = vpack.c.b16 %v432, %v431
  %v552 = vpack.c.b16 %v434, %v433
  %v553 = vpack.c.b16 %v436, %v435
  %v554 = vpack.c.b16 %v438, %v437
  %v555 = vpack.c.b16 %v440, %v439
  %v556 = vpack.c.b16 %v442, %v441
  %v557 = vpack.c.b16 %v444, %v443
  %v558 = vpack.c.b16 %v446, %v445
  %v559 = vpack.c.b16 %v448, %v447
  %v560 = vpack.c.b16 %v450, %v449
  %v561 = vpack.c.b16 %v452, %v451
  %v562 = vpack.c.b16 %v454, %v453
  %v563 = vpack.c.b16 %v456, %v455
  %v564 = vpack.c.b16 %v458, %v457
  %v565 = vpack.c.b16 %v460, %v459
  %v566 = vpack.c.b16 %v462, %v461
  %v567 = vpack.c.b16 %v464, %v463
  %v568 = vpack.c.b16 %v466, %v465
  %v569 = vpack.c.b16 %v468, %v467
  %v570 = vpack.c.b16 %v470, %v469
  %v571 = vpack.c.b16 %v472, %v471
  %v572 = vpack.c.b16 %v474, %v473
  %v573 = vpack.c.b16 %v476, %v475
  %v574 = vpack.c.b16 %v478, %v477
  %v575 = vpack.c.b16 %v480, %v479
  %v576 = vpack.c.b16 %v482, %v481
  %v577 = vpack.c.b16 %v484, %v483
  %v578 = vpack.c.b16 %v486, %v485
  %v579 = vpack.c.b16 %v488, %v487
  %v580 = vpack.c.b16 %v490, %v489
  %v581 = vpack.c.b16 %v492, %v491
  %v582 = vpack.c.b16 %v494, %v493
  %v583 = vpack.c.b16 %v496, %v495
  %v584 = vpack.c.b16 %v498, %v497
  %v585 = vpack.c.b16 %v500, %v499
  %v586 = vpack.c.b16 %v502, %v501
  %v587 = vpack.c.b16 %v504, %v503
  %v588 = vpack.c.b16 %v506, %v505
  %v589 = vpack.c.b16 %v508, %v507
  %v590 = vpack.c.b16 %v510, %v509
  %v687 = vunpack.c.l.b16 %v175
  %v688 = vunpack.c.l.b16 %v176
  %v689 = vunpack.c.l.b16 %v177
  %v690 = vunpack.c.l.b16 %v178
  %v691 = vunpack.c.l.b16 %v179
  %v692 = vunpack.c.l.b16 %v180
  %v693 = vunpack.c.l.b16 %v181
  %v694 = vunpack.c.l.b16 %v182
  %v695 = vunpack.c.l.b16 %v183
  %v696 = vunpack.c.l.b16 %v184
  %v697 = vunpack.c.l.b16 %v185
  %v698 = vunpack.c.l.b16 %v186
  %v699 = vunpack.c.l.b16 %v187
  %v700 = vunpack.c.l.b16 %v188
  %v701 = vunpack.c.l.b16 %v189
  %v702 = vunpack.c.l.b16 %v190
  %v703 = vpack.c.b16 %v688, %v687
  %v704 = vpack.c.b16 %v690, %v689
  %v705 = vpack.c.b16 %v692, %v691
  %v706 = vpack.c.b16 %v694, %v693
  %v707 = vpack.c.b16 %v696, %v695
  %v708 = vpack.c.b16 %v698, %v697
  %v709 = vpack.c.b16 %v700, %v699
  %v710 = vpack.c.b16 %v702, %v701
  %719 = vmatprep.subr.bf16.mxu0 0
  %720 = vmatpush1.bf16.msra.mxu0 %v703
  %721 = vmatprep.subr.bf16.mxu0 0
  %722 = vmatpush1.bf16.msra.mxu0 %v704
  %723 = vmatprep.subr.bf16.mxu0 0
  %724 = vmatpush1.bf16.msra.mxu0 %v705
  %725 = vmatprep.subr.bf16.mxu0 0
  %726 = vmatpush1.bf16.msra.mxu0 %v706
  %727 = vmatprep.subr.bf16.mxu0 0
  %728 = vmatpush1.bf16.msra.mxu0 %v707
  %729 = vmatprep.subr.bf16.mxu0 0
  %730 = vmatpush1.bf16.msra.mxu0 %v708
  %731 = vmatprep.subr.bf16.mxu0 0
  %732 = vmatpush1.bf16.msra.mxu0 %v709
  %733 = vmatprep.subr.bf16.mxu0 0
  %734 = vmatpush1.bf16.msra.mxu0 %v710
  %735 = vmatprep.subr.bf16.mxu0 0
  %736 = vmatpush1.bf16.msra.mxu0 0
  %737 = vmatprep.subr.bf16.mxu0 0
  %738 = vmatpush1.bf16.msra.mxu0 0
  %739 = vmatprep.subr.bf16.mxu0 0
  %740 = vmatpush1.bf16.msra.mxu0 0
  %741 = vmatprep.subr.bf16.mxu0 0
  %742 = vmatpush1.bf16.msra.mxu0 0
  %743 = vmatprep.subr.bf16.mxu0 0
  %744 = vmatpush1.bf16.msra.mxu0 0
  %745 = vmatprep.subr.bf16.mxu0 0
  %746 = vmatpush1.bf16.msra.mxu0 0
  %747 = vmatprep.subr.bf16.mxu0 0
  %748 = vmatpush1.bf16.msra.mxu0 0
  %749 = vmatprep.subr.bf16.mxu0 0
  %750 = vmatpush1.bf16.msra.mxu0 0
  %751 = vmatprep.mubr.bf16.mxu0 0
  %752 = vmatmul.mubr.bf16.gmra.mrb[0].mxu0 %v511
  %v753 = vpop.f32.mrb[0].mxu0
  %v754 = vadd.f32 0.0, %v753
  %v755 = vpop.f32.mrb[0].mxu0
  %v756 = vpop.f32.mrb[0].mxu0
  %v757 = vadd.f32 0.0, %v756
  %v758 = vpop.f32.mrb[0].mxu0
  %759 = vmatprep.mubr.bf16.mxu0 0
  %760 = vmatmul.mubr.bf16.gmra.mrb[0].mxu0 %v512
  %v761 = vpop.f32.mrb[0].mxu0
  %v762 = vadd.f32 0.0, %v761
  %v763 = vpop.f32.mrb[0].mxu0
  %v764 = vpop.f32.mrb[0].mxu0
  %v765 = vadd.f32 0.0, %v764
  %v766 = vpop.f32.mrb[0].mxu0
  %767 = vmatprep.mubr.bf16.mxu0 0
  %768 = vmatmul.mubr.bf16.gmra.mrb[0].mxu0 %v513
  %v769 = vpop.f32.mrb[0].mxu0
  %v770 = vadd.f32 0.0, %v769
  %v771 = vpop.f32.mrb[0].mxu0
  %v772 = vpop.f32.mrb[0].mxu0
  %v773 = vadd.f32 0.0, %v772
  %v774 = vpop.f32.mrb[0].mxu0
  %775 = vmatprep.mubr.bf16.mxu0 0
  %776 = vmatmul.mubr.bf16.gmra.mrb[0].mxu0 %v514
  %v777 = vpop.f32.mrb[0].mxu0
  %v778 = vadd.f32 0.0, %v777
  %v779 = vpop.f32.mrb[0].mxu0
  %v780 = vpop.f32.mrb[0].mxu0
  %v781 = vadd.f32 0.0, %v780
  %v782 = vpop.f32.mrb[0].mxu0
  %783 = vmatprep.mubr.bf16.mxu0 0
  %784 = vmatmul.mubr.bf16.gmra.mrb[0].mxu0 %v515
  %v785 = vpop.f32.mrb[0].mxu0
  %v786 = vadd.f32 0.0, %v785
  %v787 = vpop.f32.mrb[0].mxu0
  %v788 = vpop.f32.mrb[0].mxu0
  %v789 = vadd.f32 0.0, %v788
  %v790 = vpop.f32.mrb[0].mxu0
  %791 = vmatprep.mubr.bf16.mxu0 0
  %792 = vmatmul.mubr.bf16.gmra.mrb[0].mxu0 %v516
  %v793 = vpop.f32.mrb[0].mxu0
  %v794 = vadd.f32 0.0, %v793
  %v795 = vpop.f32.mrb[0].mxu0
  %v796 = vpop.f32.mrb[0].mxu0
  %v797 = vadd.f32 0.0, %v796
  %v798 = vpop.f32.mrb[0].mxu0
  %799 = vmatprep.mubr.bf16.mxu0 0
  %800 = vmatmul.mubr.bf16.gmra.mrb[0].mxu0 %v517
  %v801 = vpop.f32.mrb[0].mxu0
  %v802 = vadd.f32 0.0, %v801
  %v803 = vpop.f32.mrb[0].mxu0
  %v804 = vpop.f32.mrb[0].mxu0
  %v805 = vadd.f32 0.0, %v804
  %v806 = vpop.f32.mrb[0].mxu0
  %807 = vmatprep.mubr.bf16.mxu0 0
  %808 = vmatmul.mubr.bf16.gmra.mrb[0].mxu0 %v518
  %v809 = vpop.f32.mrb[0].mxu0
  %v810 = vadd.f32 0.0, %v809
  %v811 = vpop.f32.mrb[0].mxu0
  %v812 = vpop.f32.mrb[0].mxu0
  %v813 = vadd.f32 0.0, %v812
  %v814 = vpop.f32.mrb[0].mxu0
  %815 = vmatprep.mubr.bf16.mxu0 0
  %816 = vmatmul.mubr.bf16.gmra.mrb[0].mxu0 %v519
  %v817 = vpop.f32.mrb[0].mxu0
  %v818 = vadd.f32 0.0, %v817
  %v819 = vpop.f32.mrb[0].mxu0
  %v820 = vpop.f32.mrb[0].mxu0
  %v821 = vadd.f32 0.0, %v820
  %v822 = vpop.f32.mrb[0].mxu0
  %823 = vmatprep.mubr.bf16.mxu0 0
  %824 = vmatmul.mubr.bf16.gmra.mrb[0].mxu0 %v520
  %v825 = vpop.f32.mrb[0].mxu0
  %v826 = vadd.f32 0.0, %v825
  %v827 = vpop.f32.mrb[0].mxu0
  %v828 = vpop.f32.mrb[0].mxu0
  %v829 = vadd.f32 0.0, %v828
  %v830 = vpop.f32.mrb[0].mxu0
  %831 = vmatprep.mubr.bf16.mxu0 0
  %832 = vmatmul.mubr.bf16.gmra.mrb[0].mxu0 %v521
  %v833 = vpop.f32.mrb[0].mxu0
  %v834 = vadd.f32 0.0, %v833
  %v835 = vpop.f32.mrb[0].mxu0
  %v836 = vpop.f32.mrb[0].mxu0
  %v837 = vadd.f32 0.0, %v836
  %v838 = vpop.f32.mrb[0].mxu0
  %839 = vmatprep.mubr.bf16.mxu0 0
  %840 = vmatmul.mubr.bf16.gmra.mrb[0].mxu0 %v522
  %v841 = vpop.f32.mrb[0].mxu0
  %v842 = vadd.f32 0.0, %v841
  %v843 = vpop.f32.mrb[0].mxu0
  %v844 = vpop.f32.mrb[0].mxu0
  %v845 = vadd.f32 0.0, %v844
  %v846 = vpop.f32.mrb[0].mxu0
  %847 = vmatprep.mubr.bf16.mxu0 0
  %848 = vmatmul.mubr.bf16.gmra.mrb[0].mxu0 %v523
  %v849 = vpop.f32.mrb[0].mxu0
  %v850 = vadd.f32 0.0, %v849
  %v851 = vpop.f32.mrb[0].mxu0
  %v852 = vpop.f32.mrb[0].mxu0
  %v853 = vadd.f32 0.0, %v852
  %v854 = vpop.f32.mrb[0].mxu0
  %855 = vmatprep.mubr.bf16.mxu0 0
  %856 = vmatmul.mubr.bf16.gmra.mrb[0].mxu0 %v524
  %v857 = vpop.f32.mrb[0].mxu0
  %v858 = vadd.f32 0.0, %v857
  %v859 = vpop.f32.mrb[0].mxu0
  %v860 = vpop.f32.mrb[0].mxu0
  %v861 = vadd.f32 0.0, %v860
  %v862 = vpop.f32.mrb[0].mxu0
  %863 = vmatprep.mubr.bf16.mxu0 0
  %864 = vmatmul.mubr.bf16.gmra.mrb[0].mxu0 %v525
  %v865 = vpop.f32.mrb[0].mxu0
  %v866 = vadd.f32 0.0, %v865
  %v867 = vpop.f32.mrb[0].mxu0
  %v868 = vpop.f32.mrb[0].mxu0
  %v869 = vadd.f32 0.0, %v868
  %v870 = vpop.f32.mrb[0].mxu0
  %871 = vmatprep.mubr.bf16.mxu0 0
  %872 = vmatmul.mubr.bf16.gmra.mrb[0].mxu0 %v526
  %v873 = vpop.f32.mrb[0].mxu0
  %v874 = vadd.f32 0.0, %v873
  %v875 = vpop.f32.mrb[0].mxu0
  %v876 = vpop.f32.mrb[0].mxu0
  %v877 = vadd.f32 0.0, %v876
  %v878 = vpop.f32.mrb[0].mxu0
  %879 = vmatprep.mubr.bf16.mxu0 0
  %880 = vmatmul.mubr.bf16.gmra.mrb[0].mxu0 %v527
  %v881 = vpop.f32.mrb[0].mxu0
  %v882 = vadd.f32 0.0, %v881
  %v883 = vpop.f32.mrb[0].mxu0
  %v884 = vpop.f32.mrb[0].mxu0
  %v885 = vadd.f32 0.0, %v884
  %v886 = vpop.f32.mrb[0].mxu0
  %887 = vmatprep.mubr.bf16.mxu0 0
  %888 = vmatmul.mubr.bf16.gmra.mrb[0].mxu0 %v528
  %v889 = vpop.f32.mrb[0].mxu0
  %v890 = vadd.f32 0.0, %v889
  %v891 = vpop.f32.mrb[0].mxu0
  %v892 = vpop.f32.mrb[0].mxu0
  %v893 = vadd.f32 0.0, %v892
  %v894 = vpop.f32.mrb[0].mxu0
  %895 = vmatprep.mubr.bf16.mxu0 0
  %896 = vmatmul.mubr.bf16.gmra.mrb[0].mxu0 %v529
  %v897 = vpop.f32.mrb[0].mxu0
  %v898 = vadd.f32 0.0, %v897
  %v899 = vpop.f32.mrb[0].mxu0
  %v900 = vpop.f32.mrb[0].mxu0
  %v901 = vadd.f32 0.0, %v900
  %v902 = vpop.f32.mrb[0].mxu0
  %903 = vmatprep.mubr.bf16.mxu0 0
  %904 = vmatmul.mubr.bf16.gmra.mrb[0].mxu0 %v530
  %v905 = vpop.f32.mrb[0].mxu0
  %v906 = vadd.f32 0.0, %v905
  %v907 = vpop.f32.mrb[0].mxu0
  %v908 = vpop.f32.mrb[0].mxu0
  %v909 = vadd.f32 0.0, %v908
  %v910 = vpop.f32.mrb[0].mxu0
  %911 = vmatprep.mubr.bf16.mxu0 0
  %912 = vmatmul.mubr.bf16.gmra.mrb[0].mxu0 %v531
  %v913 = vpop.f32.mrb[0].mxu0
  %v914 = vadd.f32 0.0, %v913
  %v915 = vpop.f32.mrb[0].mxu0
  %v916 = vpop.f32.mrb[0].mxu0
  %v917 = vadd.f32 0.0, %v916
  %v918 = vpop.f32.mrb[0].mxu0
  %919 = vmatprep.mubr.bf16.mxu0 0
  %920 = vmatmul.mubr.bf16.gmra.mrb[0].mxu0 %v532
  %v921 = vpop.f32.mrb[0].mxu0
  %v922 = vadd.f32 0.0, %v921
  %v923 = vpop.f32.mrb[0].mxu0
  %v924 = vpop.f32.mrb[0].mxu0
  %v925 = vadd.f32 0.0, %v924
  %v926 = vpop.f32.mrb[0].mxu0
  %927 = vmatprep.mubr.bf16.mxu0 0
  %928 = vmatmul.mubr.bf16.gmra.mrb[0].mxu0 %v533
  %v929 = vpop.f32.mrb[0].mxu0
  %v930 = vadd.f32 0.0, %v929
  %v931 = vpop.f32.mrb[0].mxu0
  %v932 = vpop.f32.mrb[0].mxu0
  %v933 = vadd.f32 0.0, %v932
  %v934 = vpop.f32.mrb[0].mxu0
  %935 = vmatprep.mubr.bf16.mxu0 0
  %936 = vmatmul.mubr.bf16.gmra.mrb[0].mxu0 %v534
  %v937 = vpop.f32.mrb[0].mxu0
  %v938 = vadd.f32 0.0, %v937
  %v939 = vpop.f32.mrb[0].mxu0
  %v940 = vpop.f32.mrb[0].mxu0
  %v941 = vadd.f32 0.0, %v940
  %v942 = vpop.f32.mrb[0].mxu0
  %943 = vmatprep.mubr.bf16.mxu0 0
  %944 = vmatmul.mubr.bf16.gmra.mrb[0].mxu0 %v535
  %v945 = vpop.f32.mrb[0].mxu0
  %v946 = vadd.f32 0.0, %v945
  %v947 = vpop.f32.mrb[0].mxu0
  %v948 = vpop.f32.mrb[0].mxu0
  %v949 = vadd.f32 0.0, %v948
  %v950 = vpop.f32.mrb[0].mxu0
  %951 = vmatprep.mubr.bf16.mxu0 0
  %952 = vmatmul.mubr.bf16.gmra.mrb[0].mxu0 %v536
  %v953 = vpop.f32.mrb[0].mxu0
  %v954 = vadd.f32 0.0, %v953
  %v955 = vpop.f32.mrb[0].mxu0
  %v956 = vpop.f32.mrb[0].mxu0
  %v957 = vadd.f32 0.0, %v956
  %v958 = vpop.f32.mrb[0].mxu0
  %959 = vmatprep.mubr.bf16.mxu0 0
  %960 = vmatmul.mubr.bf16.gmra.mrb[0].mxu0 %v537
  %v961 = vpop.f32.mrb[0].mxu0
  %v962 = vadd.f32 0.0, %v961
  %v963 = vpop.f32.mrb[0].mxu0
  %v964 = vpop.f32.mrb[0].mxu0
  %v965 = vadd.f32 0.0, %v964
  %v966 = vpop.f32.mrb[0].mxu0
  %967 = vmatprep.mubr.bf16.mxu0 0
  %968 = vmatmul.mubr.bf16.gmra.mrb[0].mxu0 %v538
  %v969 = vpop.f32.mrb[0].mxu0
  %v970 = vadd.f32 0.0, %v969
  %v971 = vpop.f32.mrb[0].mxu0
  %v972 = vpop.f32.mrb[0].mxu0
  %v973 = vadd.f32 0.0, %v972
  %v974 = vpop.f32.mrb[0].mxu0
  %975 = vmatprep.mubr.bf16.mxu0 0
  %976 = vmatmul.mubr.bf16.gmra.mrb[0].mxu0 %v539
  %v977 = vpop.f32.mrb[0].mxu0
  %v978 = vadd.f32 0.0, %v977
  %v979 = vpop.f32.mrb[0].mxu0
  %v980 = vpop.f32.mrb[0].mxu0
  %v981 = vadd.f32 0.0, %v980
  %v982 = vpop.f32.mrb[0].mxu0
  %983 = vmatprep.mubr.bf16.mxu0 0
  %984 = vmatmul.mubr.bf16.gmra.mrb[0].mxu0 %v540
  %v985 = vpop.f32.mrb[0].mxu0
  %v986 = vadd.f32 0.0, %v985
  %v987 = vpop.f32.mrb[0].mxu0
  %v988 = vpop.f32.mrb[0].mxu0
  %v989 = vadd.f32 0.0, %v988
  %v990 = vpop.f32.mrb[0].mxu0
  %991 = vmatprep.mubr.bf16.mxu0 0
  %992 = vmatmul.mubr.bf16.gmra.mrb[0].mxu0 %v541
  %v993 = vpop.f32.mrb[0].mxu0
  %v994 = vadd.f32 0.0, %v993
  %v995 = vpop.f32.mrb[0].mxu0
  %v996 = vpop.f32.mrb[0].mxu0
  %v997 = vadd.f32 0.0, %v996
  %v998 = vpop.f32.mrb[0].mxu0
  %999 = vmatprep.mubr.bf16.mxu0 0
  %1000 = vmatmul.mubr.bf16.gmra.mrb[0].mxu0 %v542
  %v1001 = vpop.f32.mrb[0].mxu0
  %v1002 = vadd.f32 0.0, %v1001
  %v1003 = vpop.f32.mrb[0].mxu0
  %v1004 = vpop.f32.mrb[0].mxu0
  %v1005 = vadd.f32 0.0, %v1004
  %v1006 = vpop.f32.mrb[0].mxu0
  %1007 = vmatprep.mubr.bf16.mxu0 0
  %1008 = vmatmul.mubr.bf16.gmra.mrb[0].mxu0 %v543
  %v1009 = vpop.f32.mrb[0].mxu0
  %v1010 = vadd.f32 0.0, %v1009
  %v1011 = vpop.f32.mrb[0].mxu0
  %v1012 = vpop.f32.mrb[0].mxu0
  %v1013 = vadd.f32 0.0, %v1012
  %v1014 = vpop.f32.mrb[0].mxu0
  %1015 = vmatprep.mubr.bf16.mxu0 0
  %1016 = vmatmul.mubr.bf16.gmra.mrb[0].mxu0 %v544
  %v1017 = vpop.f32.mrb[0].mxu0
  %v1018 = vadd.f32 0.0, %v1017
  %v1019 = vpop.f32.mrb[0].mxu0
  %v1020 = vpop.f32.mrb[0].mxu0
  %v1021 = vadd.f32 0.0, %v1020
  %v1022 = vpop.f32.mrb[0].mxu0
  %1023 = vmatprep.mubr.bf16.mxu0 0
  %1024 = vmatmul.mubr.bf16.gmra.mrb[0].mxu0 %v545
  %v1025 = vpop.f32.mrb[0].mxu0
  %v1026 = vadd.f32 0.0, %v1025
  %v1027 = vpop.f32.mrb[0].mxu0
  %v1028 = vpop.f32.mrb[0].mxu0
  %v1029 = vadd.f32 0.0, %v1028
  %v1030 = vpop.f32.mrb[0].mxu0
  %1031 = vmatprep.mubr.bf16.mxu0 0
  %1032 = vmatmul.mubr.bf16.gmra.mrb[0].mxu0 %v546
  %v1033 = vpop.f32.mrb[0].mxu0
  %v1034 = vadd.f32 0.0, %v1033
  %v1035 = vpop.f32.mrb[0].mxu0
  %v1036 = vpop.f32.mrb[0].mxu0
  %v1037 = vadd.f32 0.0, %v1036
  %v1038 = vpop.f32.mrb[0].mxu0
  %1039 = vmatprep.mubr.bf16.mxu0 0
  %1040 = vmatmul.mubr.bf16.gmra.mrb[0].mxu0 %v547
  %v1041 = vpop.f32.mrb[0].mxu0
  %v1042 = vadd.f32 0.0, %v1041
  %v1043 = vpop.f32.mrb[0].mxu0
  %v1044 = vpop.f32.mrb[0].mxu0
  %v1045 = vadd.f32 0.0, %v1044
  %v1046 = vpop.f32.mrb[0].mxu0
  %1047 = vmatprep.mubr.bf16.mxu0 0
  %1048 = vmatmul.mubr.bf16.gmra.mrb[0].mxu0 %v548
  %v1049 = vpop.f32.mrb[0].mxu0
  %v1050 = vadd.f32 0.0, %v1049
  %v1051 = vpop.f32.mrb[0].mxu0
  %v1052 = vpop.f32.mrb[0].mxu0
  %v1053 = vadd.f32 0.0, %v1052
  %v1054 = vpop.f32.mrb[0].mxu0
  %1055 = vmatprep.mubr.bf16.mxu0 0
  %1056 = vmatmul.mubr.bf16.gmra.mrb[0].mxu0 %v549
  %v1057 = vpop.f32.mrb[0].mxu0
  %v1058 = vadd.f32 0.0, %v1057
  %v1059 = vpop.f32.mrb[0].mxu0
  %v1060 = vpop.f32.mrb[0].mxu0
  %v1061 = vadd.f32 0.0, %v1060
  %v1062 = vpop.f32.mrb[0].mxu0
  %1063 = vmatprep.mubr.bf16.mxu0 0
  %1064 = vmatmul.mubr.bf16.gmra.mrb[0].mxu0 %v550
  %v1065 = vpop.f32.mrb[0].mxu0
  %v1066 = vadd.f32 0.0, %v1065
  %v1067 = vpop.f32.mrb[0].mxu0
  %v1068 = vpop.f32.mrb[0].mxu0
  %v1069 = vadd.f32 0.0, %v1068
  %v1070 = vpop.f32.mrb[0].mxu0
  %1071 = vmatprep.mubr.bf16.mxu0 0
  %1072 = vmatmul.mubr.bf16.gmra.mrb[0].mxu0 %v551
  %v1073 = vpop.f32.mrb[0].mxu0
  %v1074 = vadd.f32 0.0, %v1073
  %v1075 = vpop.f32.mrb[0].mxu0
  %v1076 = vpop.f32.mrb[0].mxu0
  %v1077 = vadd.f32 0.0, %v1076
  %v1078 = vpop.f32.mrb[0].mxu0
  %1079 = vmatprep.mubr.bf16.mxu0 0
  %1080 = vmatmul.mubr.bf16.gmra.mrb[0].mxu0 %v552
  %v1081 = vpop.f32.mrb[0].mxu0
  %v1082 = vadd.f32 0.0, %v1081
  %v1083 = vpop.f32.mrb[0].mxu0
  %v1084 = vpop.f32.mrb[0].mxu0
  %v1085 = vadd.f32 0.0, %v1084
  %v1086 = vpop.f32.mrb[0].mxu0
  %1087 = vmatprep.mubr.bf16.mxu0 0
  %1088 = vmatmul.mubr.bf16.gmra.mrb[0].mxu0 %v553
  %v1089 = vpop.f32.mrb[0].mxu0
  %v1090 = vadd.f32 0.0, %v1089
  %v1091 = vpop.f32.mrb[0].mxu0
  %v1092 = vpop.f32.mrb[0].mxu0
  %v1093 = vadd.f32 0.0, %v1092
  %v1094 = vpop.f32.mrb[0].mxu0
  %1095 = vmatprep.mubr.bf16.mxu0 0
  %1096 = vmatmul.mubr.bf16.gmra.mrb[0].mxu0 %v554
  %v1097 = vpop.f32.mrb[0].mxu0
  %v1098 = vadd.f32 0.0, %v1097
  %v1099 = vpop.f32.mrb[0].mxu0
  %v1100 = vpop.f32.mrb[0].mxu0
  %v1101 = vadd.f32 0.0, %v1100
  %v1102 = vpop.f32.mrb[0].mxu0
  %1103 = vmatprep.mubr.bf16.mxu0 0
  %1104 = vmatmul.mubr.bf16.gmra.mrb[0].mxu0 %v555
  %v1105 = vpop.f32.mrb[0].mxu0
  %v1106 = vadd.f32 0.0, %v1105
  %v1107 = vpop.f32.mrb[0].mxu0
  %v1108 = vpop.f32.mrb[0].mxu0
  %v1109 = vadd.f32 0.0, %v1108
  %v1110 = vpop.f32.mrb[0].mxu0
  %1111 = vmatprep.mubr.bf16.mxu0 0
  %1112 = vmatmul.mubr.bf16.gmra.mrb[0].mxu0 %v556
  %v1113 = vpop.f32.mrb[0].mxu0
  %v1114 = vadd.f32 0.0, %v1113
  %v1115 = vpop.f32.mrb[0].mxu0
  %v1116 = vpop.f32.mrb[0].mxu0
  %v1117 = vadd.f32 0.0, %v1116
  %v1118 = vpop.f32.mrb[0].mxu0
  %1119 = vmatprep.mubr.bf16.mxu0 0
  %1120 = vmatmul.mubr.bf16.gmra.mrb[0].mxu0 %v557
  %v1121 = vpop.f32.mrb[0].mxu0
  %v1122 = vadd.f32 0.0, %v1121
  %v1123 = vpop.f32.mrb[0].mxu0
  %v1124 = vpop.f32.mrb[0].mxu0
  %v1125 = vadd.f32 0.0, %v1124
  %v1126 = vpop.f32.mrb[0].mxu0
  %1127 = vmatprep.mubr.bf16.mxu0 0
  %1128 = vmatmul.mubr.bf16.gmra.mrb[0].mxu0 %v558
  %v1129 = vpop.f32.mrb[0].mxu0
  %v1130 = vadd.f32 0.0, %v1129
  %v1131 = vpop.f32.mrb[0].mxu0
  %v1132 = vpop.f32.mrb[0].mxu0
  %v1133 = vadd.f32 0.0, %v1132
  %v1134 = vpop.f32.mrb[0].mxu0
  %1135 = vmatprep.mubr.bf16.mxu0 0
  %1136 = vmatmul.mubr.bf16.gmra.mrb[0].mxu0 %v559
  %v1137 = vpop.f32.mrb[0].mxu0
  %v1138 = vadd.f32 0.0, %v1137
  %v1139 = vpop.f32.mrb[0].mxu0
  %v1140 = vpop.f32.mrb[0].mxu0
  %v1141 = vadd.f32 0.0, %v1140
  %v1142 = vpop.f32.mrb[0].mxu0
  %1143 = vmatprep.mubr.bf16.mxu0 0
  %1144 = vmatmul.mubr.bf16.gmra.mrb[0].mxu0 %v560
  %v1145 = vpop.f32.mrb[0].mxu0
  %v1146 = vadd.f32 0.0, %v1145
  %v1147 = vpop.f32.mrb[0].mxu0
  %v1148 = vpop.f32.mrb[0].mxu0
  %v1149 = vadd.f32 0.0, %v1148
  %v1150 = vpop.f32.mrb[0].mxu0
  %1151 = vmatprep.mubr.bf16.mxu0 0
  %1152 = vmatmul.mubr.bf16.gmra.mrb[0].mxu0 %v561
  %v1153 = vpop.f32.mrb[0].mxu0
  %v1154 = vadd.f32 0.0, %v1153
  %v1155 = vpop.f32.mrb[0].mxu0
  %v1156 = vpop.f32.mrb[0].mxu0
  %v1157 = vadd.f32 0.0, %v1156
  %v1158 = vpop.f32.mrb[0].mxu0
  %1159 = vmatprep.mubr.bf16.mxu0 0
  %1160 = vmatmul.mubr.bf16.gmra.mrb[0].mxu0 %v562
  %v1161 = vpop.f32.mrb[0].mxu0
  %v1162 = vadd.f32 0.0, %v1161
  %v1163 = vpop.f32.mrb[0].mxu0
  %v1164 = vpop.f32.mrb[0].mxu0
  %v1165 = vadd.f32 0.0, %v1164
  %v1166 = vpop.f32.mrb[0].mxu0
  %1167 = vmatprep.mubr.bf16.mxu0 0
  %1168 = vmatmul.mubr.bf16.gmra.mrb[0].mxu0 %v563
  %v1169 = vpop.f32.mrb[0].mxu0
  %v1170 = vadd.f32 0.0, %v1169
  %v1171 = vpop.f32.mrb[0].mxu0
  %v1172 = vpop.f32.mrb[0].mxu0
  %v1173 = vadd.f32 0.0, %v1172
  %v1174 = vpop.f32.mrb[0].mxu0
  %1175 = vmatprep.mubr.bf16.mxu0 0
  %1176 = vmatmul.mubr.bf16.gmra.mrb[0].mxu0 %v564
  %v1177 = vpop.f32.mrb[0].mxu0
  %v1178 = vadd.f32 0.0, %v1177
  %v1179 = vpop.f32.mrb[0].mxu0
  %v1180 = vpop.f32.mrb[0].mxu0
  %v1181 = vadd.f32 0.0, %v1180
  %v1182 = vpop.f32.mrb[0].mxu0
  %1183 = vmatprep.mubr.bf16.mxu0 0
  %1184 = vmatmul.mubr.bf16.gmra.mrb[0].mxu0 %v565
  %v1185 = vpop.f32.mrb[0].mxu0
  %v1186 = vadd.f32 0.0, %v1185
  %v1187 = vpop.f32.mrb[0].mxu0
  %v1188 = vpop.f32.mrb[0].mxu0
  %v1189 = vadd.f32 0.0, %v1188
  %v1190 = vpop.f32.mrb[0].mxu0
  %1191 = vmatprep.mubr.bf16.mxu0 0
  %1192 = vmatmul.mubr.bf16.gmra.mrb[0].mxu0 %v566
  %v1193 = vpop.f32.mrb[0].mxu0
  %v1194 = vadd.f32 0.0, %v1193
  %v1195 = vpop.f32.mrb[0].mxu0
  %v1196 = vpop.f32.mrb[0].mxu0
  %v1197 = vadd.f32 0.0, %v1196
  %v1198 = vpop.f32.mrb[0].mxu0
  %1199 = vmatprep.mubr.bf16.mxu0 0
  %1200 = vmatmul.mubr.bf16.gmra.mrb[0].mxu0 %v567
  %v1201 = vpop.f32.mrb[0].mxu0
  %v1202 = vadd.f32 0.0, %v1201
  %v1203 = vpop.f32.mrb[0].mxu0
  %v1204 = vpop.f32.mrb[0].mxu0
  %v1205 = vadd.f32 0.0, %v1204
  %v1206 = vpop.f32.mrb[0].mxu0
  %1207 = vmatprep.mubr.bf16.mxu0 0
  %1208 = vmatmul.mubr.bf16.gmra.mrb[0].mxu0 %v568
  %v1209 = vpop.f32.mrb[0].mxu0
  %v1210 = vadd.f32 0.0, %v1209
  %v1211 = vpop.f32.mrb[0].mxu0
  %v1212 = vpop.f32.mrb[0].mxu0
  %v1213 = vadd.f32 0.0, %v1212
  %v1214 = vpop.f32.mrb[0].mxu0
  %1215 = vmatprep.mubr.bf16.mxu0 0
  %1216 = vmatmul.mubr.bf16.gmra.mrb[0].mxu0 %v569
  %v1217 = vpop.f32.mrb[0].mxu0
  %v1218 = vadd.f32 0.0, %v1217
  %v1219 = vpop.f32.mrb[0].mxu0
  %v1220 = vpop.f32.mrb[0].mxu0
  %v1221 = vadd.f32 0.0, %v1220
  %v1222 = vpop.f32.mrb[0].mxu0
  %1223 = vmatprep.mubr.bf16.mxu0 0
  %1224 = vmatmul.mubr.bf16.gmra.mrb[0].mxu0 %v570
  %v1225 = vpop.f32.mrb[0].mxu0
  %v1226 = vadd.f32 0.0, %v1225
  %v1227 = vpop.f32.mrb[0].mxu0
  %v1228 = vpop.f32.mrb[0].mxu0
  %v1229 = vadd.f32 0.0, %v1228
  %v1230 = vpop.f32.mrb[0].mxu0
  %1231 = vmatprep.mubr.bf16.mxu0 0
  %1232 = vmatmul.mubr.bf16.gmra.mrb[0].mxu0 %v571
  %v1233 = vpop.f32.mrb[0].mxu0
  %v1234 = vadd.f32 0.0, %v1233
  %v1235 = vpop.f32.mrb[0].mxu0
  %v1236 = vpop.f32.mrb[0].mxu0
  %v1237 = vadd.f32 0.0, %v1236
  %v1238 = vpop.f32.mrb[0].mxu0
  %1239 = vmatprep.mubr.bf16.mxu0 0
  %1240 = vmatmul.mubr.bf16.gmra.mrb[0].mxu0 %v572
  %v1241 = vpop.f32.mrb[0].mxu0
  %v1242 = vadd.f32 0.0, %v1241
  %v1243 = vpop.f32.mrb[0].mxu0
  %v1244 = vpop.f32.mrb[0].mxu0
  %v1245 = vadd.f32 0.0, %v1244
  %v1246 = vpop.f32.mrb[0].mxu0
  %1247 = vmatprep.mubr.bf16.mxu0 0
  %1248 = vmatmul.mubr.bf16.gmra.mrb[0].mxu0 %v573
  %v1249 = vpop.f32.mrb[0].mxu0
  %v1250 = vadd.f32 0.0, %v1249
  %v1251 = vpop.f32.mrb[0].mxu0
  %v1252 = vpop.f32.mrb[0].mxu0
  %v1253 = vadd.f32 0.0, %v1252
  %v1254 = vpop.f32.mrb[0].mxu0
  %1255 = vmatprep.mubr.bf16.mxu0 0
  %1256 = vmatmul.mubr.bf16.gmra.mrb[0].mxu0 %v574
  %v1257 = vpop.f32.mrb[0].mxu0
  %v1258 = vadd.f32 0.0, %v1257
  %v1259 = vpop.f32.mrb[0].mxu0
  %v1260 = vpop.f32.mrb[0].mxu0
  %v1261 = vadd.f32 0.0, %v1260
  %v1262 = vpop.f32.mrb[0].mxu0
  %1263 = vmatprep.mubr.bf16.mxu0 0
  %1264 = vmatmul.mubr.bf16.gmra.mrb[0].mxu0 %v575
  %v1265 = vpop.f32.mrb[0].mxu0
  %v1266 = vadd.f32 0.0, %v1265
  %v1267 = vpop.f32.mrb[0].mxu0
  %v1268 = vpop.f32.mrb[0].mxu0
  %v1269 = vadd.f32 0.0, %v1268
  %v1270 = vpop.f32.mrb[0].mxu0
  %1271 = vmatprep.mubr.bf16.mxu0 0
  %1272 = vmatmul.mubr.bf16.gmra.mrb[0].mxu0 %v576
  %v1273 = vpop.f32.mrb[0].mxu0
  %v1274 = vadd.f32 0.0, %v1273
  %v1275 = vpop.f32.mrb[0].mxu0
  %v1276 = vpop.f32.mrb[0].mxu0
  %v1277 = vadd.f32 0.0, %v1276
  %v1278 = vpop.f32.mrb[0].mxu0
  %1279 = vmatprep.mubr.bf16.mxu0 0
  %1280 = vmatmul.mubr.bf16.gmra.mrb[0].mxu0 %v577
  %v1281 = vpop.f32.mrb[0].mxu0
  %v1282 = vadd.f32 0.0, %v1281
  %v1283 = vpop.f32.mrb[0].mxu0
  %v1284 = vpop.f32.mrb[0].mxu0
  %v1285 = vadd.f32 0.0, %v1284
  %v1286 = vpop.f32.mrb[0].mxu0
  %1287 = vmatprep.mubr.bf16.mxu0 0
  %1288 = vmatmul.mubr.bf16.gmra.mrb[0].mxu0 %v578
  %v1289 = vpop.f32.mrb[0].mxu0
  %v1290 = vadd.f32 0.0, %v1289
  %v1291 = vpop.f32.mrb[0].mxu0
  %v1292 = vpop.f32.mrb[0].mxu0
  %v1293 = vadd.f32 0.0, %v1292
  %v1294 = vpop.f32.mrb[0].mxu0
  %1295 = vmatprep.mubr.bf16.mxu0 0
  %1296 = vmatmul.mubr.bf16.gmra.mrb[0].mxu0 %v579
  %v1297 = vpop.f32.mrb[0].mxu0
  %v1298 = vadd.f32 0.0, %v1297
  %v1299 = vpop.f32.mrb[0].mxu0
  %v1300 = vpop.f32.mrb[0].mxu0
  %v1301 = vadd.f32 0.0, %v1300
  %v1302 = vpop.f32.mrb[0].mxu0
  %1303 = vmatprep.mubr.bf16.mxu0 0
  %1304 = vmatmul.mubr.bf16.gmra.mrb[0].mxu0 %v580
  %v1305 = vpop.f32.mrb[0].mxu0
  %v1306 = vadd.f32 0.0, %v1305
  %v1307 = vpop.f32.mrb[0].mxu0
  %v1308 = vpop.f32.mrb[0].mxu0
  %v1309 = vadd.f32 0.0, %v1308
  %v1310 = vpop.f32.mrb[0].mxu0
  %1311 = vmatprep.mubr.bf16.mxu0 0
  %1312 = vmatmul.mubr.bf16.gmra.mrb[0].mxu0 %v581
  %v1313 = vpop.f32.mrb[0].mxu0
  %v1314 = vadd.f32 0.0, %v1313
  %v1315 = vpop.f32.mrb[0].mxu0
  %v1316 = vpop.f32.mrb[0].mxu0
  %v1317 = vadd.f32 0.0, %v1316
  %v1318 = vpop.f32.mrb[0].mxu0
  %1319 = vmatprep.mubr.bf16.mxu0 0
  %1320 = vmatmul.mubr.bf16.gmra.mrb[0].mxu0 %v582
  %v1321 = vpop.f32.mrb[0].mxu0
  %v1322 = vadd.f32 0.0, %v1321
  %v1323 = vpop.f32.mrb[0].mxu0
  %v1324 = vpop.f32.mrb[0].mxu0
  %v1325 = vadd.f32 0.0, %v1324
  %v1326 = vpop.f32.mrb[0].mxu0
  %1327 = vmatprep.mubr.bf16.mxu0 0
  %1328 = vmatmul.mubr.bf16.gmra.mrb[0].mxu0 %v583
  %v1329 = vpop.f32.mrb[0].mxu0
  %v1330 = vadd.f32 0.0, %v1329
  %v1331 = vpop.f32.mrb[0].mxu0
  %v1332 = vpop.f32.mrb[0].mxu0
  %v1333 = vadd.f32 0.0, %v1332
  %v1334 = vpop.f32.mrb[0].mxu0
  %1335 = vmatprep.mubr.bf16.mxu0 0
  %1336 = vmatmul.mubr.bf16.gmra.mrb[0].mxu0 %v584
  %v1337 = vpop.f32.mrb[0].mxu0
  %v1338 = vadd.f32 0.0, %v1337
  %v1339 = vpop.f32.mrb[0].mxu0
  %v1340 = vpop.f32.mrb[0].mxu0
  %v1341 = vadd.f32 0.0, %v1340
  %v1342 = vpop.f32.mrb[0].mxu0
  %1343 = vmatprep.mubr.bf16.mxu0 0
  %1344 = vmatmul.mubr.bf16.gmra.mrb[0].mxu0 %v585
  %v1345 = vpop.f32.mrb[0].mxu0
  %v1346 = vadd.f32 0.0, %v1345
  %v1347 = vpop.f32.mrb[0].mxu0
  %v1348 = vpop.f32.mrb[0].mxu0
  %v1349 = vadd.f32 0.0, %v1348
  %v1350 = vpop.f32.mrb[0].mxu0
  %1351 = vmatprep.mubr.bf16.mxu0 0
  %1352 = vmatmul.mubr.bf16.gmra.mrb[0].mxu0 %v586
  %v1353 = vpop.f32.mrb[0].mxu0
  %v1354 = vadd.f32 0.0, %v1353
  %v1355 = vpop.f32.mrb[0].mxu0
  %v1356 = vpop.f32.mrb[0].mxu0
  %v1357 = vadd.f32 0.0, %v1356
  %v1358 = vpop.f32.mrb[0].mxu0
  %1359 = vmatprep.mubr.bf16.mxu0 0
  %1360 = vmatmul.mubr.bf16.gmra.mrb[0].mxu0 %v587
  %v1361 = vpop.f32.mrb[0].mxu0
  %v1362 = vadd.f32 0.0, %v1361
  %v1363 = vpop.f32.mrb[0].mxu0
  %v1364 = vpop.f32.mrb[0].mxu0
  %v1365 = vadd.f32 0.0, %v1364
  %v1366 = vpop.f32.mrb[0].mxu0
  %1367 = vmatprep.mubr.bf16.mxu0 0
  %1368 = vmatmul.mubr.bf16.gmra.mrb[0].mxu0 %v588
  %v1369 = vpop.f32.mrb[0].mxu0
  %v1370 = vadd.f32 0.0, %v1369
  %v1371 = vpop.f32.mrb[0].mxu0
  %v1372 = vpop.f32.mrb[0].mxu0
  %v1373 = vadd.f32 0.0, %v1372
  %v1374 = vpop.f32.mrb[0].mxu0
  %1375 = vmatprep.mubr.bf16.mxu0 0
  %1376 = vmatmul.mubr.bf16.gmra.mrb[0].mxu0 %v589
  %v1377 = vpop.f32.mrb[0].mxu0
  %v1378 = vadd.f32 0.0, %v1377
  %v1379 = vpop.f32.mrb[0].mxu0
  %v1380 = vpop.f32.mrb[0].mxu0
  %v1381 = vadd.f32 0.0, %v1380
  %v1382 = vpop.f32.mrb[0].mxu0
  %1383 = vmatprep.mubr.bf16.mxu0 0
  %1384 = vmatmul.mubr.bf16.gmra.mrb[0].mxu0 %v590
  %v1385 = vpop.f32.mrb[0].mxu0
  %v1386 = vadd.f32 0.0, %v1385
  %v1387 = vpop.f32.mrb[0].mxu0
  %v1388 = vpop.f32.mrb[0].mxu0
  %v1389 = vadd.f32 0.0, %v1388
  %v1390 = vpop.f32.mrb[0].mxu0
  %1391 = vdwg.mxu0
  %v1392 = vmax.f32 %v754, %v757
  %v1393 = vmax.f32 %v1392, %v762
  %v1394 = vmax.f32 %v1393, %v765
  %v1395 = vmax.f32 %v1394, %v770
  %v1396 = vmax.f32 %v1395, %v773
  %v1397 = vmax.f32 %v1396, %v778
  %v1398 = vmax.f32 %v1397, %v781
  %v1399 = vmax.f32 %v1398, %v786
  %v1400 = vmax.f32 %v1399, %v789
  %v1401 = vmax.f32 %v1400, %v794
  %v1402 = vmax.f32 %v1401, %v797
  %v1403 = vmax.f32 %v1402, %v802
  %v1404 = vmax.f32 %v1403, %v805
  %v1405 = vmax.f32 %v1404, %v810
  %v1406 = vmax.f32 %v1405, %v813
  %v1407 = vmax.f32 %v1406, %v818
  %v1408 = vmax.f32 %v1407, %v821
  %v1409 = vmax.f32 %v1408, %v826
  %v1410 = vmax.f32 %v1409, %v829
  %v1411 = vrot.slane %v1410, 4
  %v1412 = vmax.f32 %v1410, %v1411
  %v1413 = vrot.slane %v1412, 2
  %v1414 = vmax.f32 %v1412, %v1413
  %v1415 = vrot.slane %v1414, 1
  %v1416 = vmax.f32 %v1414, %v1415
  %v1417 = vmax.f32 %v834, %v837
  %v1418 = vmax.f32 %v1417, %v842
  %v1419 = vmax.f32 %v1418, %v845
  %v1420 = vmax.f32 %v1419, %v850
  %v1421 = vmax.f32 %v1420, %v853
  %v1422 = vmax.f32 %v1421, %v858
  %v1423 = vmax.f32 %v1422, %v861
  %v1424 = vmax.f32 %v1423, %v866
  %v1425 = vmax.f32 %v1424, %v869
  %v1426 = vmax.f32 %v1425, %v874
  %v1427 = vmax.f32 %v1426, %v877
  %v1428 = vmax.f32 %v1427, %v882
  %v1429 = vmax.f32 %v1428, %v885
  %v1430 = vmax.f32 %v1429, %v890
  %v1431 = vmax.f32 %v1430, %v893
  %v1432 = vmax.f32 %v1431, %v898
  %v1433 = vmax.f32 %v1432, %v901
  %v1434 = vmax.f32 %v1433, %v906
  %v1435 = vmax.f32 %v1434, %v909
  %v1436 = vrot.slane %v1435, 4
  %v1437 = vmax.f32 %v1435, %v1436
  %v1438 = vrot.slane %v1437, 2
  %v1439 = vmax.f32 %v1437, %v1438
  %v1440 = vrot.slane %v1439, 1
  %v1441 = vmax.f32 %v1439, %v1440
  %v1442 = vmax.f32 %v914, %v917
  %v1443 = vmax.f32 %v1442, %v922
  %v1444 = vmax.f32 %v1443, %v925
  %v1445 = vmax.f32 %v1444, %v930
  %v1446 = vmax.f32 %v1445, %v933
  %v1447 = vmax.f32 %v1446, %v938
  %v1448 = vmax.f32 %v1447, %v941
  %v1449 = vmax.f32 %v1448, %v946
  %v1450 = vmax.f32 %v1449, %v949
  %v1451 = vmax.f32 %v1450, %v954
  %v1452 = vmax.f32 %v1451, %v957
  %v1453 = vmax.f32 %v1452, %v962
  %v1454 = vmax.f32 %v1453, %v965
  %v1455 = vmax.f32 %v1454, %v970
  %v1456 = vmax.f32 %v1455, %v973
  %v1457 = vmax.f32 %v1456, %v978
  %v1458 = vmax.f32 %v1457, %v981
  %v1459 = vmax.f32 %v1458, %v986
  %v1460 = vmax.f32 %v1459, %v989
  %v1461 = vrot.slane %v1460, 4
  %v1462 = vmax.f32 %v1460, %v1461
  %v1463 = vrot.slane %v1462, 2
  %v1464 = vmax.f32 %v1462, %v1463
  %v1465 = vrot.slane %v1464, 1
  %v1466 = vmax.f32 %v1464, %v1465
  %v1467 = vmax.f32 %v994, %v997
  %v1468 = vmax.f32 %v1467, %v1002
  %v1469 = vmax.f32 %v1468, %v1005
  %v1470 = vmax.f32 %v1469, %v1010
  %v1471 = vmax.f32 %v1470, %v1013
  %v1472 = vmax.f32 %v1471, %v1018
  %v1473 = vmax.f32 %v1472, %v1021
  %v1474 = vmax.f32 %v1473, %v1026
  %v1475 = vmax.f32 %v1474, %v1029
  %v1476 = vmax.f32 %v1475, %v1034
  %v1477 = vmax.f32 %v1476, %v1037
  %v1478 = vmax.f32 %v1477, %v1042
  %v1479 = vmax.f32 %v1478, %v1045
  %v1480 = vmax.f32 %v1479, %v1050
  %v1481 = vmax.f32 %v1480, %v1053
  %v1482 = vmax.f32 %v1481, %v1058
  %v1483 = vmax.f32 %v1482, %v1061
  %v1484 = vmax.f32 %v1483, %v1066
  %v1485 = vmax.f32 %v1484, %v1069
  %v1486 = vrot.slane %v1485, 4
  %v1487 = vmax.f32 %v1485, %v1486
  %v1488 = vrot.slane %v1487, 2
  %v1489 = vmax.f32 %v1487, %v1488
  %v1490 = vrot.slane %v1489, 1
  %v1491 = vmax.f32 %v1489, %v1490
  %v1492 = vmax.f32 %v1074, %v1077
  %v1493 = vmax.f32 %v1492, %v1082
  %v1494 = vmax.f32 %v1493, %v1085
  %v1495 = vmax.f32 %v1494, %v1090
  %v1496 = vmax.f32 %v1495, %v1093
  %v1497 = vmax.f32 %v1496, %v1098
  %v1498 = vmax.f32 %v1497, %v1101
  %v1499 = vmax.f32 %v1498, %v1106
  %v1500 = vmax.f32 %v1499, %v1109
  %v1501 = vmax.f32 %v1500, %v1114
  %v1502 = vmax.f32 %v1501, %v1117
  %v1503 = vmax.f32 %v1502, %v1122
  %v1504 = vmax.f32 %v1503, %v1125
  %v1505 = vmax.f32 %v1504, %v1130
  %v1506 = vmax.f32 %v1505, %v1133
  %v1507 = vmax.f32 %v1506, %v1138
  %v1508 = vmax.f32 %v1507, %v1141
  %v1509 = vmax.f32 %v1508, %v1146
  %v1510 = vmax.f32 %v1509, %v1149
  %v1511 = vrot.slane %v1510, 4
  %v1512 = vmax.f32 %v1510, %v1511
  %v1513 = vrot.slane %v1512, 2
  %v1514 = vmax.f32 %v1512, %v1513
  %v1515 = vrot.slane %v1514, 1
  %v1516 = vmax.f32 %v1514, %v1515
  %v1517 = vmax.f32 %v1154, %v1157
  %v1518 = vmax.f32 %v1517, %v1162
  %v1519 = vmax.f32 %v1518, %v1165
  %v1520 = vmax.f32 %v1519, %v1170
  %v1521 = vmax.f32 %v1520, %v1173
  %v1522 = vmax.f32 %v1521, %v1178
  %v1523 = vmax.f32 %v1522, %v1181
  %v1524 = vmax.f32 %v1523, %v1186
  %v1525 = vmax.f32 %v1524, %v1189
  %v1526 = vmax.f32 %v1525, %v1194
  %v1527 = vmax.f32 %v1526, %v1197
  %v1528 = vmax.f32 %v1527, %v1202
  %v1529 = vmax.f32 %v1528, %v1205
  %v1530 = vmax.f32 %v1529, %v1210
  %v1531 = vmax.f32 %v1530, %v1213
  %v1532 = vmax.f32 %v1531, %v1218
  %v1533 = vmax.f32 %v1532, %v1221
  %v1534 = vmax.f32 %v1533, %v1226
  %v1535 = vmax.f32 %v1534, %v1229
  %v1536 = vrot.slane %v1535, 4
  %v1537 = vmax.f32 %v1535, %v1536
  %v1538 = vrot.slane %v1537, 2
  %v1539 = vmax.f32 %v1537, %v1538
  %v1540 = vrot.slane %v1539, 1
  %v1541 = vmax.f32 %v1539, %v1540
  %v1542 = vmax.f32 %v1234, %v1237
  %v1543 = vmax.f32 %v1542, %v1242
  %v1544 = vmax.f32 %v1543, %v1245
  %v1545 = vmax.f32 %v1544, %v1250
  %v1546 = vmax.f32 %v1545, %v1253
  %v1547 = vmax.f32 %v1546, %v1258
  %v1548 = vmax.f32 %v1547, %v1261
  %v1549 = vmax.f32 %v1548, %v1266
  %v1550 = vmax.f32 %v1549, %v1269
  %v1551 = vmax.f32 %v1550, %v1274
  %v1552 = vmax.f32 %v1551, %v1277
  %v1553 = vmax.f32 %v1552, %v1282
  %v1554 = vmax.f32 %v1553, %v1285
  %v1555 = vmax.f32 %v1554, %v1290
  %v1556 = vmax.f32 %v1555, %v1293
  %v1557 = vmax.f32 %v1556, %v1298
  %v1558 = vmax.f32 %v1557, %v1301
  %v1559 = vmax.f32 %v1558, %v1306
  %v1560 = vmax.f32 %v1559, %v1309
  %v1561 = vrot.slane %v1560, 4
  %v1562 = vmax.f32 %v1560, %v1561
  %v1563 = vrot.slane %v1562, 2
  %v1564 = vmax.f32 %v1562, %v1563
  %v1565 = vrot.slane %v1564, 1
  %v1566 = vmax.f32 %v1564, %v1565
  %v1567 = vmax.f32 %v1314, %v1317
  %v1568 = vmax.f32 %v1567, %v1322
  %v1569 = vmax.f32 %v1568, %v1325
  %v1570 = vmax.f32 %v1569, %v1330
  %v1571 = vmax.f32 %v1570, %v1333
  %v1572 = vmax.f32 %v1571, %v1338
  %v1573 = vmax.f32 %v1572, %v1341
  %v1574 = vmax.f32 %v1573, %v1346
  %v1575 = vmax.f32 %v1574, %v1349
  %v1576 = vmax.f32 %v1575, %v1354
  %v1577 = vmax.f32 %v1576, %v1357
  %v1578 = vmax.f32 %v1577, %v1362
  %v1579 = vmax.f32 %v1578, %v1365
  %v1580 = vmax.f32 %v1579, %v1370
  %v1581 = vmax.f32 %v1580, %v1373
  %v1582 = vmax.f32 %v1581, %v1378
  %v1583 = vmax.f32 %v1582, %v1381
  %v1584 = vmax.f32 %v1583, %v1386
  %v1585 = vmax.f32 %v1584, %v1389
  %v1586 = vrot.slane %v1585, 4
  %v1587 = vmax.f32 %v1585, %v1586
  %v1588 = vrot.slane %v1587, 2
  %v1589 = vmax.f32 %v1587, %v1588
  %v1590 = vrot.slane %v1589, 1
  %v1591 = vmax.f32 %v1589, %v1590
  %v1592 = vld [vmem:[%s2] sm:$0x1]
  %v1593 = vlaneseq
  %v1594 = vshrl.u32 %v1593, 7
  %v1595 = vsub.s32 0, %v1594
  %v1596 = vrot.slane %v1592, %v1595
  %v1597 = vadd.f32 %v1416, %v1596
  %v1598 = vadd.f32 %v1441, %v1596
  %v1599 = vadd.f32 %v1466, %v1596
  %v1600 = vadd.f32 %v1491, %v1596
  %v1601 = vadd.f32 %v1516, %v1596
  %v1602 = vadd.f32 %v1541, %v1596
  %v1603 = vadd.f32 %v1566, %v1596
  %v1604 = vadd.f32 %v1591, %v1596
  %v1605 = vmax.f32 %v1597, 0.0
  %v1606 = vmax.f32 %v1598, 0.0
  %v1607 = vmax.f32 %v1599, 0.0
  %v1608 = vmax.f32 %v1600, 0.0
  %v1609 = vmax.f32 %v1601, 0.0
  %v1610 = vmax.f32 %v1602, 0.0
  %v1611 = vmax.f32 %v1603, 0.0
  %v1612 = vmax.f32 %v1604, 0.0
  %v1613 = vpack.c.bf16 %v1605, %v1605
  %v1614 = vpack.c.bf16 %v1606, %v1606
  %v1615 = vpack.c.bf16 %v1607, %v1607
  %v1616 = vpack.c.bf16 %v1608, %v1608
  %v1617 = vpack.c.bf16 %v1609, %v1609
  %v1618 = vpack.c.bf16 %v1610, %v1610
  %v1619 = vpack.c.bf16 %v1611, %v1611
  %v1620 = vpack.c.bf16 %v1612, %v1612
  %v1621 = vld [vmem:[%s1 + $0x40] sm:$0xf]
  %v1622 = vld [vmem:[%s1 + $0x44] sm:$0xf]
  %v1623 = vld [vmem:[%s1 + $0x48] sm:$0xf]
  %v1624 = vld [vmem:[%s1 + $0x4c] sm:$0xf]
  %v1625 = vld [vmem:[%s1 + $0x50] sm:$0xf]
  %v1626 = vld [vmem:[%s1 + $0x54] sm:$0xf]
  %v1627 = vld [vmem:[%s1 + $0x58] sm:$0xf]
  %v1628 = vld [vmem:[%s1 + $0x5c] sm:$0xf]
  %v1629 = vld [vmem:[%s1 + $0x60] sm:$0xf]
  %v1630 = vld [vmem:[%s1 + $0x64] sm:$0xf]
  %v1631 = vld [vmem:[%s1 + $0x68] sm:$0xf]
  %v1632 = vld [vmem:[%s1 + $0x6c] sm:$0xf]
  %v1633 = vld [vmem:[%s1 + $0x70] sm:$0xf]
  %v1634 = vld [vmem:[%s1 + $0x74] sm:$0xf]
  %v1635 = vld [vmem:[%s1 + $0x78] sm:$0xf]
  %v1636 = vld [vmem:[%s1 + $0x7c] sm:$0xf]
  %v1637 = vld [vmem:[%s2 + $0x1] sm:$0x1]
  %v1638 = vlaneseq
  %v1639 = vshrl.u32 %v1638, 7
  %v1640 = vsub.s32 0, %v1639
  %v1641 = vrot.slane %v1637, %v1640
  %v1650 = vunpack.c.l.b16 %v1613
  %v1651 = vunpack.c.l.b16 %v1614
  %v1652 = vunpack.c.l.b16 %v1615
  %v1653 = vunpack.c.l.b16 %v1616
  %v1654 = vunpack.c.l.b16 %v1617
  %v1655 = vunpack.c.l.b16 %v1618
  %v1656 = vunpack.c.l.b16 %v1619
  %v1657 = vunpack.c.l.b16 %v1620
  %v1658 = vrot.slane %v1651, 7
  %vm1659 = vcmask 1041409
  %v1660 = vsel %vm1659, %v1658, %v1650
  %v1661 = vrot.slane %v1652, 6
  %vm1662 = vcmask 1042434
  %v1663 = vsel %vm1662, %v1661, %v1660
  %v1664 = vrot.slane %v1653, 5
  %vm1665 = vcmask 1043459
  %v1666 = vsel %vm1665, %v1664, %v1663
  %v1667 = vrot.slane %v1654, 4
  %vm1668 = vcmask 1044484
  %v1669 = vsel %vm1668, %v1667, %v1666
  %v1670 = vrot.slane %v1655, 3
  %vm1671 = vcmask 1045509
  %v1672 = vsel %vm1671, %v1670, %v1669
  %v1673 = vrot.slane %v1656, 2
  %vm1674 = vcmask 1046534
  %v1675 = vsel %vm1674, %v1673, %v1672
  %v1676 = vrot.slane %v1657, 1
  %vm1677 = vcmask 1047559
  %v1678 = vsel %vm1677, %v1676, %v1675
  %v1679 = vpack.c.b16 %v1678, %v1678
  %v1697 = vunpack.c.l.b16 %v1621
  %v1698 = vunpack.c.l.b16 %v1622
  %v1699 = vunpack.c.l.b16 %v1623
  %v1700 = vunpack.c.l.b16 %v1624
  %v1701 = vunpack.c.l.b16 %v1625
  %v1702 = vunpack.c.l.b16 %v1626
  %v1703 = vunpack.c.l.b16 %v1627
  %v1704 = vunpack.c.l.b16 %v1628
  %v1705 = vunpack.c.l.b16 %v1629
  %v1706 = vunpack.c.l.b16 %v1630
  %v1707 = vunpack.c.l.b16 %v1631
  %v1708 = vunpack.c.l.b16 %v1632
  %v1709 = vunpack.c.l.b16 %v1633
  %v1710 = vunpack.c.l.b16 %v1634
  %v1711 = vunpack.c.l.b16 %v1635
  %v1712 = vunpack.c.l.b16 %v1636
  %v1713 = vpack.c.b16 %v1698, %v1697
  %v1714 = vpack.c.b16 %v1700, %v1699
  %v1715 = vpack.c.b16 %v1702, %v1701
  %v1716 = vpack.c.b16 %v1704, %v1703
  %v1717 = vpack.c.b16 %v1706, %v1705
  %v1718 = vpack.c.b16 %v1708, %v1707
  %v1719 = vpack.c.b16 %v1710, %v1709
  %v1720 = vpack.c.b16 %v1712, %v1711
  %1729 = vmatprep.subr.bf16.mxu0 0
  %1730 = vmatpush1.bf16.msra.mxu0 %v1713
  %1731 = vmatprep.subr.bf16.mxu0 0
  %1732 = vmatpush1.bf16.msra.mxu0 %v1714
  %1733 = vmatprep.subr.bf16.mxu0 0
  %1734 = vmatpush1.bf16.msra.mxu0 %v1715
  %1735 = vmatprep.subr.bf16.mxu0 0
  %1736 = vmatpush1.bf16.msra.mxu0 %v1716
  %1737 = vmatprep.subr.bf16.mxu0 0
  %1738 = vmatpush1.bf16.msra.mxu0 %v1717
  %1739 = vmatprep.subr.bf16.mxu0 0
  %1740 = vmatpush1.bf16.msra.mxu0 %v1718
  %1741 = vmatprep.subr.bf16.mxu0 0
  %1742 = vmatpush1.bf16.msra.mxu0 %v1719
  %1743 = vmatprep.subr.bf16.mxu0 0
  %1744 = vmatpush1.bf16.msra.mxu0 %v1720
  %1745 = vmatprep.subr.bf16.mxu0 0
  %1746 = vmatpush1.bf16.msra.mxu0 0
  %1747 = vmatprep.subr.bf16.mxu0 0
  %1748 = vmatpush1.bf16.msra.mxu0 0
  %1749 = vmatprep.subr.bf16.mxu0 0
  %1750 = vmatpush1.bf16.msra.mxu0 0
  %1751 = vmatprep.subr.bf16.mxu0 0
  %1752 = vmatpush1.bf16.msra.mxu0 0
  %1753 = vmatprep.subr.bf16.mxu0 0
  %1754 = vmatpush1.bf16.msra.mxu0 0
  %1755 = vmatprep.subr.bf16.mxu0 0
  %1756 = vmatpush1.bf16.msra.mxu0 0
  %1757 = vmatprep.subr.bf16.mxu0 0
  %1758 = vmatpush1.bf16.msra.mxu0 0
  %1759 = vmatprep.subr.bf16.mxu0 0
  %1760 = vmatpush1.bf16.msra.mxu0 0
  %1761 = vmatprep.mubr.bf16.mxu0 0
  %1762 = vmatmul.mubr.bf16.gmra.mrb[0].mxu0 %v1679
  %v1763 = vpop.f32.mrb[0].mxu0
  %v1764 = vadd.f32 %v1641, %v1763
  %v1765 = vpop.f32.mrb[0].mxu0
  %v1766 = vpop.f32.mrb[0].mxu0
  %v1767 = vpop.f32.mrb[0].mxu0
  %1768 = vdwg.mxu0
  %v1769 = vmax.f32 %v1764, 0.0
  %v1770 = vld [vmem:[%s2 + $0x2] sm:$0x1]
  %v1771 = vlaneseq
  %v1772 = vshrl.u32 %v1771, 7
  %v1773 = vsub.s32 0, %v1772
  %v1774 = vrot.slane %v1770, %v1773
  %v1775 = vmul.f32 %v1769, %v1774
  %1776 = vadd.xlane.f32.xlu0 %v1775
  %v1777 = vpop.xlane.xlu0 %1776
  %v1778 = vld [vmem:[%s2 + $0x3] sm:$0x1]
  %v1779 = vlaneseq
  %v1780 = vshrl.u32 %v1779, 7
  %v1781 = vsub.s32 0, %v1780
  %v1782 = vrot.slane %v1778, %v1781
  %v1783 = vmul.f32 %v1769, %v1782
  %1784 = vadd.xlane.f32.xlu0 %v1783
  %v1785 = vpop.xlane.xlu0 %1784
  %v1786 = vlaneseq
  %v1787 = vand.u32 %v1786, 127
  %vm1788 = vcmp.eq.s32.totalorder %v1787, 0
  %v1789 = vsel %vm1788, %v1777, %v1785
  %v1790 = vld [vmem:[%s2 + $0x4] sm:$0x1]
  %v1791 = vlaneseq
  %v1792 = vshrl.u32 %v1791, 7
  %v1793 = vsub.s32 0, %v1792
  %v1794 = vrot.slane %v1790, %v1793
  %v1795 = vadd.f32 %v1789, %v1794
  %v1796 = vmax.f32 %v1795, 0.0
  %vm1797 = vcmp.lt.s32.totalorder %v1787, 2
  %v1798 = vsel %vm1797, %v1796, -inf
  %1799 = vmax.xlane.f32.xlu0 %v1798
  %v1800 = vpop.xlane.xlu0 %1799
  %v1801 = vsub.f32 %v1798, %v1800
  %v1802 = vmul.f32 %v1801, 1.442695
  %v1803 = vpow.pop %v1802
  %1804 = vadd.xlane.f32.xlu0 %v1803
  %v1805 = vpop.xlane.xlu0 %1804
  %v1806 = vrcp.pop %v1805
  %v1807 = vmul.f32 %v1803, %v1806
  %1808 = vst [vmem:[%s3] sm:$0xff] %v1807
  // Predicated region
  $region14: #{_lambda_.1} parent=0 // pred_check
    _
  $region15: #{_lambda_.1} parent=0 // pred_check_branch
    %1810 = sbr.rel (0) target = $region17
  $region16: #{_lambda_.1} parent=0 // pred_region
    _
  $region17: #{_lambda_.1} parent=0 // pred_fallthru
    _
  // Predicated region
  $region18: #{_lambda_.1} parent=0 // pred_check
    _
  $region19: #{_lambda_.1} parent=0 // pred_check_branch
    %1812 = sbr.rel (0) target = $region21
  $region20: #{_lambda_.1} parent=0 // pred_region
    _
  $region21: #{_lambda_.1} parent=0 // pred_fallthru
    _

</llo_original>
